<compile_context>
chip_gen: v7x
topology: tpu7x:2x2x1
jax: 0.10.0
libtpu: 0.0.40
codegen_flags: <defaults>
</compile_context>

<pallas_src>
import math
import functools

import jax
import jax.numpy as jnp
from jax import lax
from jax.experimental import pallas as pl
from jax.experimental.pallas import tpu as pltpu


def _mha_kernel(key_ref, value_ref, query_ref,
                wk_ref, bk_ref, wv_ref, bv_ref, wq_ref, bq_ref,
                wo_ref, bo_ref,
                *out_and_scratch,
                num_heads, dim_per_head, need_attn):
    if need_attn:
        out_ref, attn_ref, kproj_ref, vproj_ref, ctx_ref = out_and_scratch
    else:
        out_ref, kproj_ref, vproj_ref, ctx_ref = out_and_scratch
        attn_ref = None

    compute_dtype = query_ref.dtype
    qi = pl.program_id(1)

    # Project the full key/value sequence once per batch row (first query tile),
    # cache in VMEM scratch and reuse for every query tile of this batch row.
    @pl.when(qi == 0)
    def _():
        K = jnp.dot(key_ref[...], wk_ref[...].astype(compute_dtype),
                    preferred_element_type=jnp.float32) + bk_ref[...]
        V = jnp.dot(value_ref[...], wv_ref[...].astype(compute_dtype),
                    preferred_element_type=jnp.float32) + bv_ref[...]
        kproj_ref[...] = K.astype(compute_dtype)
        vproj_ref[...] = V.astype(compute_dtype)

    # Query projection for this tile.  wq/bq were pre-scaled by
    # 1/sqrt(dim_per_head) in the wrapper, so no per-element scaling pass here.
    Q = (jnp.dot(query_ref[...], wq_ref[...].astype(compute_dtype),
                 preferred_element_type=jnp.float32)
         + bq_ref[...]).astype(compute_dtype)

    TQ = Q.shape[0]
    S = kproj_ref.shape[0]

    if need_attn:
        scores_sum = jnp.zeros((TQ, S), jnp.float32)

    # contract last dims (dh), no batch dims: Qh [TQ,dh] x Kh [S,dh] -> [TQ,S]
    dn_scores = (((1,), (1,)), ((), ()))

    for h in range(num_heads):                 # static unroll over heads
        lo = h * dim_per_head
        hi = lo + dim_per_head
        Qh = Q[:, lo:hi]
        Kh = kproj_ref[:, lo:hi]
        Vh = vproj_ref[:, lo:hi]

        s = lax.dot_general(Qh, Kh, dn_scores,
                            preferred_element_type=jnp.float32)     # [TQ, S] fp32
        if need_attn:
            scores_sum = scores_sum + s

        # softmax along the key axis (fp32 numerics)
        m = jnp.max(s, axis=-1, keepdims=True)
        p = jnp.exp(s - m)
        denom = jnp.sum(p, axis=-1, keepdims=True)
        r = pl.reciprocal(denom, approx=True)       # EUP slot
        r = r * (2.0 - denom * r)                   # one Newton step -> ~fp32 accuracy
        attn = (p * r).astype(compute_dtype)

        # dropout: identity (eval mode)
        ctx_ref[:, lo:hi] = jnp.dot(attn, Vh,
                                    preferred_element_type=jnp.float32
                                    ).astype(compute_dtype)

    out = jnp.dot(ctx_ref[...], wo_ref[...].astype(compute_dtype),
                  preferred_element_type=jnp.float32) + bo_ref[...]
    out_ref[...] = out.astype(out_ref.dtype)

    if need_attn:
        attn_ref[...] = scores_sum * (1.0 / num_heads)


def _choose_q_block(S):
    """Largest query tile that keeps blocks (8,128)-legal and VMEM bounded."""
    if S <= 256:
        return S
    for tq in (512, 256, 128, 64, 32, 16, 8):
        if S % tq == 0:
            return tq
    return S


def multi_head_attn_pallas(key, value, query, params, *, num_heads,
                           need_attn=False, q_block=None):
    """Pallas implementation of MultiHeadAttn.forward (eval mode).

    key/value/query: [B, S, D] or [B, N_b, N_w, D] (4-D reproduces the torch
    module's quirk of using `key` for all three).  `params` are raw
    nn.Linear-style weights ([D_in, D_out]) / biases ([1, D_out]).
    Returns (output, attn_scores_or_None).
    """
    dim_size = key.shape
    reshape = False
    if key.ndim == 4:
        key = key.reshape(dim_size[0], -1, dim_size[3])
        value = key
        query = key
        reshape = True

    B, S, D = key.shape
    assert D % num_heads == 0
    out_dim = params["wo"].shape[1]
    dim_per_head = D // num_heads

    # Fold 1/sqrt(dim_per_head) into the (small) query weight/bias instead of a
    # per-element divide on [B, S, D] activations inside the kernel.
    inv_scale = jnp.asarray(1.0 / math.sqrt(dim_per_head), params["wq"].dtype)
    wq = params["wq"] * inv_scale
    bq = params["bq"] * inv_scale

    TQ = q_block if q_block is not None else _choose_q_block(S)
    assert S % TQ == 0 and (TQ == S or TQ % 8 == 0), "query tile must be 8-aligned"
    nq = S // TQ

    kernel = functools.partial(
        _mha_kernel,
        num_heads=num_heads,
        dim_per_head=dim_per_head,
        need_attn=need_attn,
    )

    kv_spec = pl.BlockSpec((None, S, D), lambda b, qi: (b, 0, 0))   # full seq, fetched once per batch
    q_spec = pl.BlockSpec((None, TQ, D), lambda b, qi: (b, qi, 0))
    wqkv_spec = pl.BlockSpec((D, D), lambda b, qi: (0, 0))
    bqkv_spec = pl.BlockSpec((1, D), lambda b, qi: (0, 0))
    wo_spec = pl.BlockSpec((D, out_dim), lambda b, qi: (0, 0))
    bo_spec = pl.BlockSpec((1, out_dim), lambda b, qi: (0, 0))

    out_shapes = [jax.ShapeDtypeStruct((B, S, out_dim), key.dtype)]
    out_specs = [pl.BlockSpec((None, TQ, out_dim), lambda b, qi: (b, qi, 0))]
    if need_attn:
        out_shapes.append(jax.ShapeDtypeStruct((B, S, S), jnp.float32))
        out_specs.append(pl.BlockSpec((None, TQ, S), lambda b, qi: (b, qi, 0)))

    compute_dtype = key.dtype
    scratch_shapes = [
        pltpu.VMEM((S, D), compute_dtype),    # cached K projection (per batch row)
        pltpu.VMEM((S, D), compute_dtype),    # cached V projection (per batch row)
        pltpu.VMEM((TQ, D), compute_dtype),   # per-tile context (replaces concat)
    ]

    results = pl.pallas_call(
        kernel,
        out_shape=tuple(out_shapes),
        grid=(B, nq),
        in_specs=[
            kv_spec, kv_spec, q_spec,
            wqkv_spec, bqkv_spec,   # keys
            wqkv_spec, bqkv_spec,   # values
            wqkv_spec, bqkv_spec,   # query (pre-scaled)
            wo_spec, bo_spec,       # final linear
        ],
        out_specs=tuple(out_specs),
        scratch_shapes=scratch_shapes,
        compiler_params=pltpu.CompilerParams(
            dimension_semantics=("parallel", "arbitrary")),
    )(key, value, query,
      params["wk"], params["bk"],
      params["wv"], params["bv"],
      wq, bq,
      params["wo"], params["bo"])

    if need_attn:
        out, attn_scores = results
    else:
        out = results[0] if isinstance(results, (tuple, list)) else results
        attn_scores = None

    if reshape:
        out = out.reshape(dim_size[0], dim_size[1], dim_size[2], -1)
    return out, attn_scores


def _reference_jax(key, value, query, params, *, num_heads):
    """Pure-JAX reference mirroring the torch forward (eval mode, 3-D inputs)."""
    B, S, D = key.shape
    dh = D // num_heads
    scale = math.sqrt(dh)
    K = key @ params["wk"] + params["bk"][0]
    V = value @ params["wv"] + params["bv"][0]
    Q = (query @ params["wq"] + params["bq"][0]) / scale
    K = K.reshape(B, S, num_heads, dh).transpose(0, 2, 1, 3)
    V = V.reshape(B, S, num_heads, dh).transpose(0, 2, 1, 3)
    Q = Q.reshape(B, S, num_heads, dh).transpose(0, 2, 1, 3)
    scores = jnp.einsum("bhqd,bhkd->bhqk", Q, K).astype(jnp.float32)
    attn = jax.nn.softmax(scores, axis=-1).astype(Q.dtype)
    ctx = jnp.einsum("bhqk,bhkd->bhqd", attn, V)
    ctx = ctx.transpose(0, 2, 1, 3).reshape(B, S, D)
    out = ctx @ params["wo"] + params["bo"][0]
    return out, jnp.mean(scores, axis=1)


def _init_params(rng, input_dim, out_dim):
    """Deterministic nn.Linear-style init: U(-1/sqrt(fan_in), 1/sqrt(fan_in))."""
    keys = jax.random.split(rng, 8)
    b = 1.0 / math.sqrt(input_dim)
    u = lambda k, shape: jax.random.uniform(k, shape, jnp.float32, minval=-b, maxval=b)
    return {
        "wk": u(keys[0], (input_dim, input_dim)), "bk": u(keys[1], (1, input_dim)),
        "wv": u(keys[2], (input_dim, input_dim)), "bv": u(keys[3], (1, input_dim)),
        "wq": u(keys[4], (input_dim, input_dim)), "bq": u(keys[5], (1, input_dim)),
        "wo": u(keys[6], (input_dim, out_dim)),   "bo": u(keys[7], (1, out_dim)),
    }


if __name__ == "__main__":
    B, S, D = 2, 8, 32          # batch, tokens (N_b), input_dim
    num_heads = 4               # D % num_heads == 0  -> dim_per_head = 8
    out_dim = 32

    root = jax.random.PRNGKey(0)
    k_key, k_val, k_qry, k_par = jax.random.split(root, 4)
    key = jax.random.normal(k_key, (B, S, D), jnp.float32)
    value = jax.random.normal(k_val, (B, S, D), jnp.float32)
    query = jax.random.normal(k_qry, (B, S, D), jnp.float32)
    params = _init_params(k_par, D, out_dim)

    ref_out, ref_attn = _reference_jax(key, value, query, params, num_heads=num_heads)

    # need_attn=True path (also returns mean of pre-softmax scores over heads)
    out, attn = multi_head_attn_pallas(key, value, query, params,
                                       num_heads=num_heads, need_attn=True)
    out = jax.block_until_ready(out)
    attn = jax.block_until_ready(attn)
    assert out.shape == (B, S, out_dim)
    assert attn.shape == (B, S, S)
    assert jnp.allclose(out, ref_out, atol=1e-4, rtol=1e-4)
    assert jnp.allclose(attn, ref_attn, atol=1e-4, rtol=1e-4)

    # need_attn=False path: scores are neither accumulated nor written back to HBM.
    out2, attn2 = multi_head_attn_pallas(key, value, query, params,
                                         num_heads=num_heads, need_attn=False)
    out2 = jax.block_until_ready(out2)
    assert attn2 is None
    assert jnp.allclose(out2, ref_out, atol=1e-4, rtol=1e-4)

    # Exercise the query-tiled grid (grid=(B, S//TQ) with TQ < S).
    B2, S2, D2, H2 = 2, 16, 32, 4
    kk, kp = jax.random.split(jax.random.PRNGKey(1), 2)
    x2 = jax.random.normal(kk, (B2, S2, D2), jnp.float32)
    params2 = _init_params(kp, D2, D2)
    out3, attn3 = multi_head_attn_pallas(x2, x2, x2, params2,
                                         num_heads=H2, need_attn=True, q_block=8)
    out3 = jax.block_until_ready(out3)
    attn3 = jax.block_until_ready(attn3)
    ref_out3, ref_attn3 = _reference_jax(x2, x2, x2, params2, num_heads=H2)
    assert jnp.allclose(out3, ref_out3, atol=1e-4, rtol=1e-4)
    assert jnp.allclose(attn3, ref_attn3, atol=1e-4, rtol=1e-4)

    # Exercise the 4-D input path (module reuses `key` for key/value/query).
    x4 = jax.random.normal(jax.random.PRNGKey(2), (2, 2, 4, D), jnp.float32)
    out4, attn4 = multi_head_attn_pallas(x4, x4, x4, params,
                                         num_heads=num_heads, need_attn=True)
    out4 = jax.block_until_ready(out4)
    x4f = x4.reshape(2, -1, D)
    ref_out4, ref_attn4 = _reference_jax(x4f, x4f, x4f, params, num_heads=num_heads)
    assert out4.shape == (2, 2, 4, out_dim)
    assert jnp.allclose(out4.reshape(2, -1, out_dim), ref_out4, atol=1e-4, rtol=1e-4)
    assert jnp.allclose(attn4, ref_attn4, atol=1e-4, rtol=1e-4)

    print("KERNEL_OK")
</pallas_src>

<mosaic_0001>
module attributes {stable_mosaic.version = 11 : i64} {
  func.func @_mha_kernel(%arg0: i32, %arg1: i32, %arg2: memref<1x8x32xf32, #tpu.memory_space<vmem>>, %arg3: memref<1x8x32xf32, #tpu.memory_space<vmem>>, %arg4: memref<1x8x32xf32, #tpu.memory_space<vmem>>, %arg5: memref<32x32xf32, #tpu.memory_space<vmem>>, %arg6: memref<1x32xf32, #tpu.memory_space<vmem>>, %arg7: memref<32x32xf32, #tpu.memory_space<vmem>>, %arg8: memref<1x32xf32, #tpu.memory_space<vmem>>, %arg9: memref<32x32xf32, #tpu.memory_space<vmem>>, %arg10: memref<1x32xf32, #tpu.memory_space<vmem>>, %arg11: memref<32x32xf32, #tpu.memory_space<vmem>>, %arg12: memref<1x32xf32, #tpu.memory_space<vmem>>, %arg13: memref<1x8x32xf32, #tpu.memory_space<vmem>>, %arg14: memref<1x8x8xf32, #tpu.memory_space<vmem>>, %arg15: memref<8x32xf32, #tpu.memory_space<vmem>>, %arg16: memref<8x32xf32, #tpu.memory_space<vmem>>, %arg17: memref<8x32xf32, #tpu.memory_space<vmem>>) attributes {dimension_semantics = [#tpu.dimension_semantics<parallel>, #tpu.dimension_semantics<arbitrary>], iteration_bounds = array<i64: 2, 1>, scalar_prefetch = 0 : i64, scratch_operands = 3 : i64, tpu.core_type = #tpu.core_type<tc>, window_params = [{transform_indices = @transform_0, window_bounds = array<i64: 1, 8, 32>}, {transform_indices = @transform_1, window_bounds = array<i64: 1, 8, 32>}, {transform_indices = @transform_2, window_bounds = array<i64: 1, 8, 32>}, {pipeline_mode = #tpu.pipeline_mode<synchronous>, transform_indices = @transform_3, window_bounds = array<i64: 32, 32>}, {pipeline_mode = #tpu.pipeline_mode<synchronous>, transform_indices = @transform_4, window_bounds = array<i64: 1, 32>}, {pipeline_mode = #tpu.pipeline_mode<synchronous>, transform_indices = @transform_5, window_bounds = array<i64: 32, 32>}, {pipeline_mode = #tpu.pipeline_mode<synchronous>, transform_indices = @transform_6, window_bounds = array<i64: 1, 32>}, {pipeline_mode = #tpu.pipeline_mode<synchronous>, transform_indices = @transform_7, window_bounds = array<i64: 32, 32>}, {pipeline_mode = #tpu.pipeline_mode<synchronous>, transform_indices = @transform_8, window_bounds = array<i64: 1, 32>}, {pipeline_mode = #tpu.pipeline_mode<synchronous>, transform_indices = @transform_9, window_bounds = array<i64: 32, 32>}, {pipeline_mode = #tpu.pipeline_mode<synchronous>, transform_indices = @transform_10, window_bounds = array<i64: 1, 32>}, {transform_indices = @transform_11, window_bounds = array<i64: 1, 8, 32>}, {transform_indices = @transform_12, window_bounds = array<i64: 1, 8, 8>}]} {
    %c0_i32 = arith.constant 0 : i32
    %0 = arith.cmpi eq, %arg1, %c0_i32 : i32
    %1 = arith.extui %0 : i1 to i32
    %c0_i32_0 = arith.constant 0 : i32
    %2 = arith.cmpi ne, %1, %c0_i32_0 : i32
    scf.if %2 {
      %c0_63 = arith.constant 0 : index
      %c0_64 = arith.constant 0 : index
      %c0_65 = arith.constant 0 : index
      %109 = vector.load %arg2[%c0_63, %c0_64, %c0_65] : memref<1x8x32xf32, #tpu.memory_space<vmem>>, vector<1x8x32xf32>
      %110 = vector.shape_cast %109 : vector<1x8x32xf32> to vector<8x32xf32>
      %c0_66 = arith.constant 0 : index
      %c0_67 = arith.constant 0 : index
      %111 = vector.load %arg5[%c0_66, %c0_67] : memref<32x32xf32, #tpu.memory_space<vmem>>, vector<32x32xf32>
      %cst_68 = arith.constant dense<0.000000e+00> : vector<8x32xf32>
      %112 = tpu.matmul %110, %111, %cst_68 {dimension_numbers = #tpu.dot_dimension_numbers<[1], [0], [0], [1], [0, 0, 1, 1], [], []>} : vector<8x32xf32>, vector<32x32xf32>, vector<8x32xf32> -> vector<8x32xf32>
      %c0_69 = arith.constant 0 : index
      %c0_70 = arith.constant 0 : index
      %113 = vector.load %arg6[%c0_69, %c0_70] : memref<1x32xf32, #tpu.memory_space<vmem>>, vector<1x32xf32>
      %114 = vector.broadcast %113 : vector<1x32xf32> to vector<8x32xf32>
      %115 = arith.addf %112, %114 : vector<8x32xf32>
      %c0_71 = arith.constant 0 : index
      %c0_72 = arith.constant 0 : index
      %c0_73 = arith.constant 0 : index
      %116 = vector.load %arg3[%c0_71, %c0_72, %c0_73] : memref<1x8x32xf32, #tpu.memory_space<vmem>>, vector<1x8x32xf32>
      %117 = vector.shape_cast %116 : vector<1x8x32xf32> to vector<8x32xf32>
      %c0_74 = arith.constant 0 : index
      %c0_75 = arith.constant 0 : index
      %118 = vector.load %arg7[%c0_74, %c0_75] : memref<32x32xf32, #tpu.memory_space<vmem>>, vector<32x32xf32>
      %cst_76 = arith.constant dense<0.000000e+00> : vector<8x32xf32>
      %119 = tpu.matmul %117, %118, %cst_76 {dimension_numbers = #tpu.dot_dimension_numbers<[1], [0], [0], [1], [0, 0, 1, 1], [], []>} : vector<8x32xf32>, vector<32x32xf32>, vector<8x32xf32> -> vector<8x32xf32>
      %c0_77 = arith.constant 0 : index
      %c0_78 = arith.constant 0 : index
      %120 = vector.load %arg8[%c0_77, %c0_78] : memref<1x32xf32, #tpu.memory_space<vmem>>, vector<1x32xf32>
      %121 = vector.broadcast %120 : vector<1x32xf32> to vector<8x32xf32>
      %122 = arith.addf %119, %121 : vector<8x32xf32>
      %c0_79 = arith.constant 0 : index
      %c0_80 = arith.constant 0 : index
      %123 = vector.load %arg15[%c0_79, %c0_80] : memref<8x32xf32, #tpu.memory_space<vmem>>, vector<8x32xf32>
      tpu.vector_store %arg15[%c0_79, %c0_80], %115 {strides = array<i32>} : memref<8x32xf32, #tpu.memory_space<vmem>>, vector<8x32xf32>,
      %c0_81 = arith.constant 0 : index
      %c0_82 = arith.constant 0 : index
      %124 = vector.load %arg16[%c0_81, %c0_82] : memref<8x32xf32, #tpu.memory_space<vmem>>, vector<8x32xf32>
      tpu.vector_store %arg16[%c0_81, %c0_82], %122 {strides = array<i32>} : memref<8x32xf32, #tpu.memory_space<vmem>>, vector<8x32xf32>,
    } else {
    }
    %c0 = arith.constant 0 : index
    %c0_1 = arith.constant 0 : index
    %c0_2 = arith.constant 0 : index
    %3 = vector.load %arg4[%c0, %c0_1, %c0_2] : memref<1x8x32xf32, #tpu.memory_space<vmem>>, vector<1x8x32xf32>
    %4 = vector.shape_cast %3 : vector<1x8x32xf32> to vector<8x32xf32>
    %c0_3 = arith.constant 0 : index
    %c0_4 = arith.constant 0 : index
    %5 = vector.load %arg9[%c0_3, %c0_4] : memref<32x32xf32, #tpu.memory_space<vmem>>, vector<32x32xf32>
    %cst = arith.constant dense<0.000000e+00> : vector<8x32xf32>
    %6 = tpu.matmul %4, %5, %cst {dimension_numbers = #tpu.dot_dimension_numbers<[1], [0], [0], [1], [0, 0, 1, 1], [], []>} : vector<8x32xf32>, vector<32x32xf32>, vector<8x32xf32> -> vector<8x32xf32>
    %c0_5 = arith.constant 0 : index
    %c0_6 = arith.constant 0 : index
    %7 = vector.load %arg10[%c0_5, %c0_6] : memref<1x32xf32, #tpu.memory_space<vmem>>, vector<1x32xf32>
    %8 = vector.broadcast %7 : vector<1x32xf32> to vector<8x32xf32>
    %9 = arith.addf %6, %8 : vector<8x32xf32>
    %cst_7 = arith.constant 0.000000e+00 : f32
    %10 = vector.broadcast %cst_7 : f32 to vector<8x8xf32>
    %11 = vector.extract_strided_slice %9 {offsets = [0, 0], sizes = [8, 8], strides = [1, 1]} : vector<8x32xf32> to vector<8x8xf32>
    %c0_8 = arith.constant 0 : index
    %c0_9 = arith.constant 0 : index
    %12 = vector.load %arg15[%c0_8, %c0_9] : memref<8x32xf32, #tpu.memory_space<vmem>>, vector<8x8xf32>
    %c0_10 = arith.constant 0 : index
    %c0_11 = arith.constant 0 : index
    %13 = vector.load %arg16[%c0_10, %c0_11] : memref<8x32xf32, #tpu.memory_space<vmem>>, vector<8x8xf32>
    %cst_12 = arith.constant dense<0.000000e+00> : vector<8x8xf32>
    %14 = tpu.matmul %11, %12, %cst_12 {dimension_numbers = #tpu.dot_dimension_numbers<[1], [1], [0], [0], [0, 0, 1, 0], [], []>} : vector<8x8xf32>, vector<8x8xf32>, vector<8x8xf32> -> vector<8x8xf32>
    %15 = arith.addf %10, %14 : vector<8x8xf32>
    %cst_13 = arith.constant dense<0xFF800000> : vector<8xf32>
    %16 = vector.multi_reduction <maximumf>, %14, %cst_13 [1] : vector<8x8xf32> to vector<8xf32>
    %17 = vector.shape_cast %16 : vector<8xf32> to vector<8x1xf32>
    %18 = vector.broadcast %17 : vector<8x1xf32> to vector<8x8xf32>
    %19 = arith.subf %14, %18 : vector<8x8xf32>
    %20 = math.exp %19 : vector<8x8xf32>
    %cst_14 = arith.constant dense<0.000000e+00> : vector<8xf32>
    %21 = vector.multi_reduction <add>, %20, %cst_14 [1] : vector<8x8xf32> to vector<8xf32>
    %22 = vector.shape_cast %21 : vector<8xf32> to vector<8x1xf32>
    %23 = tpu.reciprocal %22 {approx = true} : vector<8x1xf32> -> vector<8x1xf32>
    %24 = arith.mulf %22, %23 : vector<8x1xf32>
    %cst_15 = arith.constant 2.000000e+00 : f32
    %25 = vector.broadcast %cst_15 : f32 to vector<8x1xf32>
    %26 = arith.subf %25, %24 : vector<8x1xf32>
    %27 = arith.mulf %23, %26 : vector<8x1xf32>
    %28 = vector.broadcast %27 : vector<8x1xf32> to vector<8x8xf32>
    %29 = arith.mulf %20, %28 : vector<8x8xf32>
    %cst_16 = arith.constant dense<0.000000e+00> : vector<8x8xf32>
    %30 = tpu.matmul %29, %13, %cst_16 {dimension_numbers = #tpu.dot_dimension_numbers<[1], [0], [0], [1], [0, 0, 1, 1], [], []>} : vector<8x8xf32>, vector<8x8xf32>, vector<8x8xf32> -> vector<8x8xf32>
    %c0_17 = arith.constant 0 : index
    %c0_18 = arith.constant 0 : index
    %31 = vector.load %arg17[%c0_17, %c0_18] : memref<8x32xf32, #tpu.memory_space<vmem>>, vector<8x8xf32>
    tpu.vector_store %arg17[%c0_17, %c0_18], %30 {strides = array<i32>} : memref<8x32xf32, #tpu.memory_space<vmem>>, vector<8x8xf32>,
    %32 = vector.extract_strided_slice %9 {offsets = [0, 8], sizes = [8, 8], strides = [1, 1]} : vector<8x32xf32> to vector<8x8xf32>
    %c0_19 = arith.constant 0 : index
    %c8 = arith.constant 8 : index
    %33 = vector.load %arg15[%c0_19, %c8] : memref<8x32xf32, #tpu.memory_space<vmem>>, vector<8x8xf32>
    %c0_20 = arith.constant 0 : index
    %c8_21 = arith.constant 8 : index
    %34 = vector.load %arg16[%c0_20, %c8_21] : memref<8x32xf32, #tpu.memory_space<vmem>>, vector<8x8xf32>
    %cst_22 = arith.constant dense<0.000000e+00> : vector<8x8xf32>
    %35 = tpu.matmul %32, %33, %cst_22 {dimension_numbers = #tpu.dot_dimension_numbers<[1], [1], [0], [0], [0, 0, 1, 0], [], []>} : vector<8x8xf32>, vector<8x8xf32>, vector<8x8xf32> -> vector<8x8xf32>
    %36 = arith.addf %15, %35 : vector<8x8xf32>
    %cst_23 = arith.constant dense<0xFF800000> : vector<8xf32>
    %37 = vector.multi_reduction <maximumf>, %35, %cst_23 [1] : vector<8x8xf32> to vector<8xf32>
    %38 = vector.shape_cast %37 : vector<8xf32> to vector<8x1xf32>
    %39 = vector.broadcast %38 : vector<8x1xf32> to vector<8x8xf32>
    %40 = arith.subf %35, %39 : vector<8x8xf32>
    %41 = math.exp %40 : vector<8x8xf32>
    %cst_24 = arith.constant dense<0.000000e+00> : vector<8xf32>
    %42 = vector.multi_reduction <add>, %41, %cst_24 [1] : vector<8x8xf32> to vector<8xf32>
    %43 = vector.shape_cast %42 : vector<8xf32> to vector<8x1xf32>
    %44 = tpu.reciprocal %43 {approx = true} : vector<8x1xf32> -> vector<8x1xf32>
    %45 = arith.mulf %43, %44 : vector<8x1xf32>
    %cst_25 = arith.constant 2.000000e+00 : f32
    %46 = vector.broadcast %cst_25 : f32 to vector<8x1xf32>
    %47 = arith.subf %46, %45 : vector<8x1xf32>
    %48 = arith.mulf %44, %47 : vector<8x1xf32>
    %49 = vector.broadcast %48 : vector<8x1xf32> to vector<8x8xf32>
    %50 = arith.mulf %41, %49 : vector<8x8xf32>
    %cst_26 = arith.constant dense<0.000000e+00> : vector<8x8xf32>
    %51 = tpu.matmul %50, %34, %cst_26 {dimension_numbers = #tpu.dot_dimension_numbers<[1], [0], [0], [1], [0, 0, 1, 1], [], []>} : vector<8x8xf32>, vector<8x8xf32>, vector<8x8xf32> -> vector<8x8xf32>
    %c0_27 = arith.constant 0 : index
    %c8_28 = arith.constant 8 : index
    %52 = vector.load %arg17[%c0_27, %c8_28] : memref<8x32xf32, #tpu.memory_space<vmem>>, vector<8x8xf32>
    tpu.vector_store %arg17[%c0_27, %c8_28], %51 {strides = array<i32>} : memref<8x32xf32, #tpu.memory_space<vmem>>, vector<8x8xf32>,
    %53 = vector.extract_strided_slice %9 {offsets = [0, 16], sizes = [8, 8], strides = [1, 1]} : vector<8x32xf32> to vector<8x8xf32>
    %c0_29 = arith.constant 0 : index
    %c16 = arith.constant 16 : index
    %54 = vector.load %arg15[%c0_29, %c16] : memref<8x32xf32, #tpu.memory_space<vmem>>, vector<8x8xf32>
    %c0_30 = arith.constant 0 : index
    %c16_31 = arith.constant 16 : index
    %55 = vector.load %arg16[%c0_30, %c16_31] : memref<8x32xf32, #tpu.memory_space<vmem>>, vector<8x8xf32>
    %cst_32 = arith.constant dense<0.000000e+00> : vector<8x8xf32>
    %56 = tpu.matmul %53, %54, %cst_32 {dimension_numbers = #tpu.dot_dimension_numbers<[1], [1], [0], [0], [0, 0, 1, 0], [], []>} : vector<8x8xf32>, vector<8x8xf32>, vector<8x8xf32> -> vector<8x8xf32>
    %57 = arith.addf %36, %56 : vector<8x8xf32>
    %cst_33 = arith.constant dense<0xFF800000> : vector<8xf32>
    %58 = vector.multi_reduction <maximumf>, %56, %cst_33 [1] : vector<8x8xf32> to vector<8xf32>
    %59 = vector.shape_cast %58 : vector<8xf32> to vector<8x1xf32>
    %60 = vector.broadcast %59 : vector<8x1xf32> to vector<8x8xf32>
    %61 = arith.subf %56, %60 : vector<8x8xf32>
    %62 = math.exp %61 : vector<8x8xf32>
    %cst_34 = arith.constant dense<0.000000e+00> : vector<8xf32>
    %63 = vector.multi_reduction <add>, %62, %cst_34 [1] : vector<8x8xf32> to vector<8xf32>
    %64 = vector.shape_cast %63 : vector<8xf32> to vector<8x1xf32>
    %65 = tpu.reciprocal %64 {approx = true} : vector<8x1xf32> -> vector<8x1xf32>
    %66 = arith.mulf %64, %65 : vector<8x1xf32>
    %cst_35 = arith.constant 2.000000e+00 : f32
    %67 = vector.broadcast %cst_35 : f32 to vector<8x1xf32>
    %68 = arith.subf %67, %66 : vector<8x1xf32>
    %69 = arith.mulf %65, %68 : vector<8x1xf32>
    %70 = vector.broadcast %69 : vector<8x1xf32> to vector<8x8xf32>
    %71 = arith.mulf %62, %70 : vector<8x8xf32>
    %cst_36 = arith.constant dense<0.000000e+00> : vector<8x8xf32>
    %72 = tpu.matmul %71, %55, %cst_36 {dimension_numbers = #tpu.dot_dimension_numbers<[1], [0], [0], [1], [0, 0, 1, 1], [], []>} : vector<8x8xf32>, vector<8x8xf32>, vector<8x8xf32> -> vector<8x8xf32>
    %c0_37 = arith.constant 0 : index
    %c16_38 = arith.constant 16 : index
    %73 = vector.load %arg17[%c0_37, %c16_38] : memref<8x32xf32, #tpu.memory_space<vmem>>, vector<8x8xf32>
    tpu.vector_store %arg17[%c0_37, %c16_38], %72 {strides = array<i32>} : memref<8x32xf32, #tpu.memory_space<vmem>>, vector<8x8xf32>,
    %74 = vector.extract_strided_slice %9 {offsets = [0, 24], sizes = [8, 8], strides = [1, 1]} : vector<8x32xf32> to vector<8x8xf32>
    %c0_39 = arith.constant 0 : index
    %c24 = arith.constant 24 : index
    %75 = vector.load %arg15[%c0_39, %c24] : memref<8x32xf32, #tpu.memory_space<vmem>>, vector<8x8xf32>
    %c0_40 = arith.constant 0 : index
    %c24_41 = arith.constant 24 : index
    %76 = vector.load %arg16[%c0_40, %c24_41] : memref<8x32xf32, #tpu.memory_space<vmem>>, vector<8x8xf32>
    %cst_42 = arith.constant dense<0.000000e+00> : vector<8x8xf32>
    %77 = tpu.matmul %74, %75, %cst_42 {dimension_numbers = #tpu.dot_dimension_numbers<[1], [1], [0], [0], [0, 0, 1, 0], [], []>} : vector<8x8xf32>, vector<8x8xf32>, vector<8x8xf32> -> vector<8x8xf32>
    %78 = arith.addf %57, %77 : vector<8x8xf32>
    %cst_43 = arith.constant dense<0xFF800000> : vector<8xf32>
    %79 = vector.multi_reduction <maximumf>, %77, %cst_43 [1] : vector<8x8xf32> to vector<8xf32>
    %80 = vector.shape_cast %79 : vector<8xf32> to vector<8x1xf32>
    %81 = vector.broadcast %80 : vector<8x1xf32> to vector<8x8xf32>
    %82 = arith.subf %77, %81 : vector<8x8xf32>
    %83 = math.exp %82 : vector<8x8xf32>
    %cst_44 = arith.constant dense<0.000000e+00> : vector<8xf32>
    %84 = vector.multi_reduction <add>, %83, %cst_44 [1] : vector<8x8xf32> to vector<8xf32>
    %85 = vector.shape_cast %84 : vector<8xf32> to vector<8x1xf32>
    %86 = tpu.reciprocal %85 {approx = true} : vector<8x1xf32> -> vector<8x1xf32>
    %87 = arith.mulf %85, %86 : vector<8x1xf32>
    %cst_45 = arith.constant 2.000000e+00 : f32
    %88 = vector.broadcast %cst_45 : f32 to vector<8x1xf32>
    %89 = arith.subf %88, %87 : vector<8x1xf32>
    %90 = arith.mulf %86, %89 : vector<8x1xf32>
    %91 = vector.broadcast %90 : vector<8x1xf32> to vector<8x8xf32>
    %92 = arith.mulf %83, %91 : vector<8x8xf32>
    %cst_46 = arith.constant dense<0.000000e+00> : vector<8x8xf32>
    %93 = tpu.matmul %92, %76, %cst_46 {dimension_numbers = #tpu.dot_dimension_numbers<[1], [0], [0], [1], [0, 0, 1, 1], [], []>} : vector<8x8xf32>, vector<8x8xf32>, vector<8x8xf32> -> vector<8x8xf32>
    %c0_47 = arith.constant 0 : index
    %c24_48 = arith.constant 24 : index
    %94 = vector.load %arg17[%c0_47, %c24_48] : memref<8x32xf32, #tpu.memory_space<vmem>>, vector<8x8xf32>
    tpu.vector_store %arg17[%c0_47, %c24_48], %93 {strides = array<i32>} : memref<8x32xf32, #tpu.memory_space<vmem>>, vector<8x8xf32>,
    %c0_49 = arith.constant 0 : index
    %c0_50 = arith.constant 0 : index
    %95 = vector.load %arg17[%c0_49, %c0_50] : memref<8x32xf32, #tpu.memory_space<vmem>>, vector<8x32xf32>
    %c0_51 = arith.constant 0 : index
    %c0_52 = arith.constant 0 : index
    %96 = vector.load %arg11[%c0_51, %c0_52] : memref<32x32xf32, #tpu.memory_space<vmem>>, vector<32x32xf32>
    %cst_53 = arith.constant dense<0.000000e+00> : vector<8x32xf32>
    %97 = tpu.matmul %95, %96, %cst_53 {dimension_numbers = #tpu.dot_dimension_numbers<[1], [0], [0], [1], [0, 0, 1, 1], [], []>} : vector<8x32xf32>, vector<32x32xf32>, vector<8x32xf32> -> vector<8x32xf32>
    %c0_54 = arith.constant 0 : index
    %c0_55 = arith.constant 0 : index
    %98 = vector.load %arg12[%c0_54, %c0_55] : memref<1x32xf32, #tpu.memory_space<vmem>>, vector<1x32xf32>
    %99 = vector.broadcast %98 : vector<1x32xf32> to vector<8x32xf32>
    %100 = arith.addf %97, %99 : vector<8x32xf32>
    %c0_56 = arith.constant 0 : index
    %c0_57 = arith.constant 0 : index
    %c0_58 = arith.constant 0 : index
    %101 = vector.load %arg13[%c0_56, %c0_57, %c0_58] : memref<1x8x32xf32, #tpu.memory_space<vmem>>, vector<1x8x32xf32>
    %102 = vector.shape_cast %101 : vector<1x8x32xf32> to vector<8x32xf32>
    %103 = vector.shape_cast %100 : vector<8x32xf32> to vector<1x8x32xf32>
    tpu.vector_store %arg13[%c0_56, %c0_57, %c0_58], %103 {strides = array<i32>} : memref<1x8x32xf32, #tpu.memory_space<vmem>>, vector<1x8x32xf32>,
    %cst_59 = arith.constant 2.500000e-01 : f32
    %104 = vector.broadcast %cst_59 : f32 to vector<8x8xf32>
    %105 = arith.mulf %78, %104 : vector<8x8xf32>
    %c0_60 = arith.constant 0 : index
    %c0_61 = arith.constant 0 : index
    %c0_62 = arith.constant 0 : index
    %106 = vector.load %arg14[%c0_60, %c0_61, %c0_62] : memref<1x8x8xf32, #tpu.memory_space<vmem>>, vector<1x8x8xf32>
    %107 = vector.shape_cast %106 : vector<1x8x8xf32> to vector<8x8xf32>
    %108 = vector.shape_cast %105 : vector<8x8xf32> to vector<1x8x8xf32>
    tpu.vector_store %arg14[%c0_60, %c0_61, %c0_62], %108 {strides = array<i32>} : memref<1x8x8xf32, #tpu.memory_space<vmem>>, vector<1x8x8xf32>,
    return
  }
  func.func @transform_0(%arg0: i32, %arg1: i32) -> (i32, i32, i32) {
    %c0_i32 = arith.constant 0 : i32
    %c0_i32_0 = arith.constant 0 : i32
    %c0_i32_1 = arith.constant 0 : i32
    return %arg0, %c0_i32, %c0_i32_0 : i32, i32, i32
  }
  func.func @transform_1(%arg0: i32, %arg1: i32) -> (i32, i32, i32) {
    %c0_i32 = arith.constant 0 : i32
    %c0_i32_0 = arith.constant 0 : i32
    %c0_i32_1 = arith.constant 0 : i32
    return %arg0, %c0_i32, %c0_i32_0 : i32, i32, i32
  }
  func.func @transform_2(%arg0: i32, %arg1: i32) -> (i32, i32, i32) {
    %c0_i32 = arith.constant 0 : i32
    %c0_i32_0 = arith.constant 0 : i32
    return %arg0, %arg1, %c0_i32 : i32, i32, i32
  }
  func.func @transform_3(%arg0: i32, %arg1: i32) -> (i32, i32) {
    %c0_i32 = arith.constant 0 : i32
    %c0_i32_0 = arith.constant 0 : i32
    %c0_i32_1 = arith.constant 0 : i32
    return %c0_i32, %c0_i32_0 : i32, i32
  }
  func.func @transform_4(%arg0: i32, %arg1: i32) -> (i32, i32) {
    %c0_i32 = arith.constant 0 : i32
    %c0_i32_0 = arith.constant 0 : i32
    %c0_i32_1 = arith.constant 0 : i32
    return %c0_i32, %c0_i32_0 : i32, i32
  }
  func.func @transform_5(%arg0: i32, %arg1: i32) -> (i32, i32) {
    %c0_i32 = arith.constant 0 : i32
    %c0_i32_0 = arith.constant 0 : i32
    %c0_i32_1 = arith.constant 0 : i32
    return %c0_i32, %c0_i32_0 : i32, i32
  }
  func.func @transform_6(%arg0: i32, %arg1: i32) -> (i32, i32) {
    %c0_i32 = arith.constant 0 : i32
    %c0_i32_0 = arith.constant 0 : i32
    %c0_i32_1 = arith.constant 0 : i32
    return %c0_i32, %c0_i32_0 : i32, i32
  }
  func.func @transform_7(%arg0: i32, %arg1: i32) -> (i32, i32) {
    %c0_i32 = arith.constant 0 : i32
    %c0_i32_0 = arith.constant 0 : i32
    %c0_i32_1 = arith.constant 0 : i32
    return %c0_i32, %c0_i32_0 : i32, i32
  }
  func.func @transform_8(%arg0: i32, %arg1: i32) -> (i32, i32) {
    %c0_i32 = arith.constant 0 : i32
    %c0_i32_0 = arith.constant 0 : i32
    %c0_i32_1 = arith.constant 0 : i32
    return %c0_i32, %c0_i32_0 : i32, i32
  }
  func.func @transform_9(%arg0: i32, %arg1: i32) -> (i32, i32) {
    %c0_i32 = arith.constant 0 : i32
    %c0_i32_0 = arith.constant 0 : i32
    %c0_i32_1 = arith.constant 0 : i32
    return %c0_i32, %c0_i32_0 : i32, i32
  }
  func.func @transform_10(%arg0: i32, %arg1: i32) -> (i32, i32) {
    %c0_i32 = arith.constant 0 : i32
    %c0_i32_0 = arith.constant 0 : i32
    %c0_i32_1 = arith.constant 0 : i32
    return %c0_i32, %c0_i32_0 : i32, i32
  }
  func.func @transform_11(%arg0: i32, %arg1: i32) -> (i32, i32, i32) {
    %c0_i32 = arith.constant 0 : i32
    %c0_i32_0 = arith.constant 0 : i32
    return %arg0, %arg1, %c0_i32 : i32, i32, i32
  }
  func.func @transform_12(%arg0: i32, %arg1: i32) -> (i32, i32, i32) {
    %c0_i32 = arith.constant 0 : i32
    %c0_i32_0 = arith.constant 0 : i32
    return %arg0, %arg1, %c0_i32 : i32, i32, i32
  }
}

</mosaic_0001>

<llo_original>
// kernel: tpu_custom_call.1
$region0: #{tpu_custom_call.1}
  #allocation0 [shape = 'u32[]', space=smem, size = 0x4, offset = 0x4, fixed_abs, tag = 'smem constant byte address 0x4 - core index']
  #allocation1 [shape = 'u32[144,128]{1,0:T(1,128)}', space=vmem, size = 0x12000, scoped, tag = 'internal scratch']
  #allocation2 [shape = 'f32[8,32]{1,0:T(8,128)}', space=vmem, size = 0x1000, scoped, tag = 'scratch operand']
  #allocation3 [shape = 'f32[8,32]{1,0:T(8,128)}', space=vmem, size = 0x1000, scoped, tag = 'scratch operand']
  #allocation4 [shape = 'f32[8,32]{1,0:T(8,128)}', space=vmem, size = 0x1000, scoped, tag = 'scratch operand']
  %s0 = inlined_call_operand.hbm [shape: f32[2,8,32], index: 0, kind: input, shape index: {}]
  %s1 = inlined_call_operand.hbm [shape: f32[2,8,32], index: 1, kind: input, shape index: {}]
  %s2 = inlined_call_operand.hbm [shape: f32[2,8,32], index: 2, kind: input, shape index: {}]
  %s3 = inlined_call_operand.hbm [shape: f32[32,32], index: 3, kind: input, shape index: {}]
  %s4 = inlined_call_operand.vmem [shape: f32[1,32], index: 4, kind: input, shape index: {}]
  %s5 = inlined_call_operand.hbm [shape: f32[32,32], index: 5, kind: input, shape index: {}]
  %s6 = inlined_call_operand.vmem [shape: f32[1,32], index: 6, kind: input, shape index: {}]
  %s7 = inlined_call_operand.hbm [shape: f32[32,32], index: 7, kind: input, shape index: {}]
  %s8 = inlined_call_operand.hbm [shape: f32[1,32], index: 8, kind: input, shape index: {}]
  %s9 = inlined_call_operand.vmem [shape: f32[32,32], index: 9, kind: input, shape index: {}]
  %s10 = inlined_call_operand.vmem [shape: f32[1,32], index: 10, kind: input, shape index: {}]
  %s11 = inlined_call_operand.hbm [shape: f32[2,8,32], index: 11, kind: output, shape index: {0}]
  %s12 = inlined_call_operand.hbm [shape: f32[2,8,8], index: 12, kind: output, shape index: {1}]
  %13 = xla_tuple %s11, %s12
  %s14 = sld [smem:[#allocation0]]
  $region117: #{tpu_custom_call.1} parent=0
    _
  %s16 = ssub.s32 1, %s14
  %s17 = scalar_select 0, %s16, %s14
  $region1: #{tpu_custom_call.1} parent=0
    #allocation5 [shape = 'u8[8192]{0}', space=vmem, size = 0x2000, scoped, tag = 'input window, operand 0']
    #allocation6 [shape = 's32[2]{0}', space=sflag, size = 0x8, scoped, tag = 'scoped memory for tpu_custom_call.1']
    #allocation7 [shape = 's32[2]{0}', space=sflag, size = 0x8, scoped, tag = 'scoped memory for tpu_custom_call.1']
    #allocation8 [shape = 'u8[8192]{0}', space=vmem, size = 0x2000, scoped, tag = 'input window, operand 1']
    #allocation9 [shape = 's32[2]{0}', space=sflag, size = 0x8, scoped, tag = 'scoped memory for tpu_custom_call.1']
    #allocation10 [shape = 'u8[8192]{0}', space=vmem, size = 0x2000, scoped, tag = 'input window, operand 2']
    #allocation11 [shape = 'u8[16384]{0}', space=vmem, size = 0x4000, scoped, tag = 'input window, operand 3, single buffered']
    #allocation12 [shape = 's32[1]{0}', space=sflag, size = 0x4, scoped, tag = 'scoped memory for tpu_custom_call.1']
    #allocation13 [shape = 'u8[16384]{0}', space=vmem, size = 0x4000, scoped, tag = 'input window, operand 5, single buffered']
    #allocation14 [shape = 'u8[16384]{0}', space=vmem, size = 0x4000, scoped, tag = 'input window, operand 7, single buffered']
    #allocation15 [shape = 's32[1]{0}', space=sflag, size = 0x4, scoped, tag = 'scoped memory for tpu_custom_call.1']
    #allocation16 [shape = 'u8[512]{0}', space=vmem, size = 0x400, scoped, tag = 'input window, operand 8, single buffered']
    #allocation17 [shape = 'u8[8192]{0}', space=vmem, size = 0x2000, scoped, tag = 'output window, operand 0']
    #allocation18 [shape = 'u8[8192]{0}', space=vmem, size = 0x2000, scoped, tag = 'output window, operand 1']
    #allocation19 [shape = 's32[2]{0}', space=sflag, size = 0x8, scoped, tag = 'scoped memory for tpu_custom_call.1']
    %18 = vsyncpa [#allocation6], 0
    %s19 = scalar_lea.sflag [#allocation6], 1
    %20 = vsyncpa %s19, 0
    %21 = vsyncpa [#allocation9], 0
    %s22 = scalar_lea.sflag [#allocation9], 1
    %23 = vsyncpa %s22, 0
    %24 = vsyncpa [#allocation12], 0
    %25 = vsyncpa [#allocation15], 0
    %26 = vsyncpa [#allocation7], 0
    %s27 = scalar_lea.sflag [#allocation7], 1
    %28 = vsyncpa %s27, 0
    %29 = vsyncpa [#allocation19], 0
    %s30 = scalar_lea.sflag [#allocation19], 1
    %31 = vsyncpa %s30, 0
    loop: start=0, step=1, limit=4
    $region2: #{tpu_custom_call.1} parent=1 // loop_pre_header
      _
    $region3: #{tpu_custom_call.1} parent=1 // loop_header
      %s33 = sphi 0, %s37
      %p34 = scmp.ge.s32.totalorder %s33, 4
      %s40 = sphi 0, %s52
      %s41 = sphi 0, %s48
      %s42 = sphi 0, %s40
      %s43 = sphi 0, %s41
      %s44 = sphi 0, %s42
      %s45 = sphi 0, %s43
      %s55 = sphi 0, %s57
      %s58 = sphi 0, %s55
      %s59 = sphi 0, %s58
      %s75 = sphi 0, %s59
      %s81 = sphi 0, %s83
      %s84 = sphi 0, %s81
      %s85 = sphi 0, %s84
      %s101 = sphi 0, %s85
      %s109 = sphi 0, %s111
      %s112 = sphi 0, %s109
      %s113 = sphi 0, %s112
      %s129 = sphi 0, %s113
      %s133 = sphi 0, %s133
      %s135 = sphi 0, %s133
      %s136 = sphi 0, %s135
      %s150 = sphi 0, %s136
      %s154 = sphi 0, %s154
      %s156 = sphi 0, %s154
      %s157 = sphi 0, %s156
      %s171 = sphi 0, %s157
      %s175 = sphi 0, %s175
      %s177 = sphi 0, %s175
      %s178 = sphi 0, %s177
      %s192 = sphi 0, %s178
      %s196 = sphi 0, %s196
      %s198 = sphi 0, %s196
      %s199 = sphi 0, %s198
      %s213 = sphi 0, %s199
      %s217 = sphi 0, %s217
      %s219 = sphi 0, %s217
      %s220 = sphi 0, %s219
      %s234 = sphi 0, %s220
      %s238 = sphi 0, %s238
      %s240 = sphi 0, %s238
      %s241 = sphi 0, %s240
      %s255 = sphi 0, %s241
      %s259 = sphi 0, %s259
      %s261 = sphi 0, %s259
      %s262 = sphi 0, %s261
      %s276 = sphi 0, %s262
      %s280 = sphi 0, %s280
      %s282 = sphi 0, %s280
      %s283 = sphi 0, %s282
      %s297 = sphi 0, %s283
      %s305 = sphi 0, %s307
      %s308 = sphi 0, %s305
      %s309 = sphi 0, %s308
      %s325 = sphi 0, %s309
      %s333 = sphi 0, %s335
      %s336 = sphi 0, %s333
      %s337 = sphi 0, %s336
      %s353 = sphi 0, %s337
    $region4: #{tpu_custom_call.1} parent=1 // loop_header_branch
      %36 = sbr.rel (%p34) target = $region8
    $region5: #{tpu_custom_call.1} parent=1 // loop_body
      %s38 = ssub.s32 %s33, 1
      %s39 = ssub.s32 %s33, 2
      %s46 = sadd.s32 1, %s41
      %p47 = scmp.ge.s32.totalorder %s46, 1
      %s48 = scalar_select %p47, 0, %s46
      %s49 = sadd.s32 1, %s40
      %s50 = scalar_select %p47, %s49, %s40
      %p51 = scmp.ge.s32.totalorder %s50, 2
      %s52 = scalar_select %p51, 0, %s50
      %s53 = ssub.s32 %s40, %s52
      %p54 = scmp.eq.s32.totalorder %s53, 0
      %s56 = sadd.s32 %s55, 1
      %s57 = scalar_select %p54, %s55, %s56
      %p60 = pneg %p54
      %p61 = scmp.eq.s32.totalorder %s33, 1
      %p62 = por %p60, %p61
      %p63 = scmp.ne.s32.totalorder %s55, %s58
      %p64 = scmp.eq.s32.totalorder %s33, 0
      %p65 = por %p63, %p64
      %p66 = scmp.ne.s32.totalorder %s55, %s58
      %p67 = scmp.eq.s32.totalorder %s38, 1
      %p68 = por %p66, %p67
      %p69 = scmp.ne.s32.totalorder %s58, %s59
      %p70 = scmp.eq.s32.totalorder %s38, 0
      %p71 = por %p69, %p70
      %p72 = scmp.ne.s32.totalorder %s58, %s59
      %p73 = scmp.eq.s32.totalorder %s39, 1
      %p74 = por %p72, %p73
      %p76 = scmp.ne.s32.totalorder %s59, %s75
      %p77 = scmp.eq.s32.totalorder %s39, 0
      %p78 = por %p76, %p77
      %s79 = ssub.s32 %s40, %s52
      %p80 = scmp.eq.s32.totalorder %s79, 0
      %s82 = sadd.s32 %s81, 1
      %s83 = scalar_select %p80, %s81, %s82
      %p86 = pneg %p80
      %p87 = scmp.eq.s32.totalorder %s33, 1
      %p88 = por %p86, %p87
      %p89 = scmp.ne.s32.totalorder %s81, %s84
      %p90 = scmp.eq.s32.totalorder %s33, 0
      %p91 = por %p89, %p90
      %p92 = scmp.ne.s32.totalorder %s81, %s84
      %p93 = scmp.eq.s32.totalorder %s38, 1
      %p94 = por %p92, %p93
      %p95 = scmp.ne.s32.totalorder %s84, %s85
      %p96 = scmp.eq.s32.totalorder %s38, 0
      %p97 = por %p95, %p96
      %p98 = scmp.ne.s32.totalorder %s84, %s85
      %p99 = scmp.eq.s32.totalorder %s39, 1
      %p100 = por %p98, %p99
      %p102 = scmp.ne.s32.totalorder %s85, %s101
      %p103 = scmp.eq.s32.totalorder %s39, 0
      %p104 = por %p102, %p103
      %s105 = ssub.s32 %s40, %s52
      %s106 = ssub.s32 %s41, %s48
      %s107 = sor.u32 %s105, %s106
      %p108 = scmp.eq.s32.totalorder %s107, 0
      %s110 = sadd.s32 %s109, 1
      %s111 = scalar_select %p108, %s109, %s110
      %p114 = pneg %p108
      %p115 = scmp.eq.s32.totalorder %s33, 1
      %p116 = por %p114, %p115
      %p117 = scmp.ne.s32.totalorder %s109, %s112
      %p118 = scmp.eq.s32.totalorder %s33, 0
      %p119 = por %p117, %p118
      %p120 = scmp.ne.s32.totalorder %s109, %s112
      %p121 = scmp.eq.s32.totalorder %s38, 1
      %p122 = por %p120, %p121
      %p123 = scmp.ne.s32.totalorder %s112, %s113
      %p124 = scmp.eq.s32.totalorder %s38, 0
      %p125 = por %p123, %p124
      %p126 = scmp.ne.s32.totalorder %s112, %s113
      %p127 = scmp.eq.s32.totalorder %s39, 1
      %p128 = por %p126, %p127
      %p130 = scmp.ne.s32.totalorder %s113, %s129
      %p131 = scmp.eq.s32.totalorder %s39, 0
      %p132 = por %p130, %p131
      %s134 = sadd.s32 %s133, 1
      %p137 = scmp.eq.s32.totalorder %s33, 1
      %p138 = scmp.ne.s32.totalorder %s133, %s135
      %p139 = scmp.eq.s32.totalorder %s33, 0
      %p140 = por %p138, %p139
      %p141 = scmp.ne.s32.totalorder %s133, %s135
      %p142 = scmp.eq.s32.totalorder %s38, 1
      %p143 = por %p141, %p142
      %p144 = scmp.ne.s32.totalorder %s135, %s136
      %p145 = scmp.eq.s32.totalorder %s38, 0
      %p146 = por %p144, %p145
      %p147 = scmp.ne.s32.totalorder %s135, %s136
      %p148 = scmp.eq.s32.totalorder %s39, 1
      %p149 = por %p147, %p148
      %p151 = scmp.ne.s32.totalorder %s136, %s150
      %p152 = scmp.eq.s32.totalorder %s39, 0
      %p153 = por %p151, %p152
      %s155 = sadd.s32 %s154, 1
      %p158 = scmp.eq.s32.totalorder %s33, 1
      %p159 = scmp.ne.s32.totalorder %s154, %s156
      %p160 = scmp.eq.s32.totalorder %s33, 0
      %p161 = por %p159, %p160
      %p162 = scmp.ne.s32.totalorder %s154, %s156
      %p163 = scmp.eq.s32.totalorder %s38, 1
      %p164 = por %p162, %p163
      %p165 = scmp.ne.s32.totalorder %s156, %s157
      %p166 = scmp.eq.s32.totalorder %s38, 0
      %p167 = por %p165, %p166
      %p168 = scmp.ne.s32.totalorder %s156, %s157
      %p169 = scmp.eq.s32.totalorder %s39, 1
      %p170 = por %p168, %p169
      %p172 = scmp.ne.s32.totalorder %s157, %s171
      %p173 = scmp.eq.s32.totalorder %s39, 0
      %p174 = por %p172, %p173
      %s176 = sadd.s32 %s175, 1
      %p179 = scmp.eq.s32.totalorder %s33, 1
      %p180 = scmp.ne.s32.totalorder %s175, %s177
      %p181 = scmp.eq.s32.totalorder %s33, 0
      %p182 = por %p180, %p181
      %p183 = scmp.ne.s32.totalorder %s175, %s177
      %p184 = scmp.eq.s32.totalorder %s38, 1
      %p185 = por %p183, %p184
      %p186 = scmp.ne.s32.totalorder %s177, %s178
      %p187 = scmp.eq.s32.totalorder %s38, 0
      %p188 = por %p186, %p187
      %p189 = scmp.ne.s32.totalorder %s177, %s178
      %p190 = scmp.eq.s32.totalorder %s39, 1
      %p191 = por %p189, %p190
      %p193 = scmp.ne.s32.totalorder %s178, %s192
      %p194 = scmp.eq.s32.totalorder %s39, 0
      %p195 = por %p193, %p194
      %s197 = sadd.s32 %s196, 1
      %p200 = scmp.eq.s32.totalorder %s33, 1
      %p201 = scmp.ne.s32.totalorder %s196, %s198
      %p202 = scmp.eq.s32.totalorder %s33, 0
      %p203 = por %p201, %p202
      %p204 = scmp.ne.s32.totalorder %s196, %s198
      %p205 = scmp.eq.s32.totalorder %s38, 1
      %p206 = por %p204, %p205
      %p207 = scmp.ne.s32.totalorder %s198, %s199
      %p208 = scmp.eq.s32.totalorder %s38, 0
      %p209 = por %p207, %p208
      %p210 = scmp.ne.s32.totalorder %s198, %s199
      %p211 = scmp.eq.s32.totalorder %s39, 1
      %p212 = por %p210, %p211
      %p214 = scmp.ne.s32.totalorder %s199, %s213
      %p215 = scmp.eq.s32.totalorder %s39, 0
      %p216 = por %p214, %p215
      %s218 = sadd.s32 %s217, 1
      %p221 = scmp.eq.s32.totalorder %s33, 1
      %p222 = scmp.ne.s32.totalorder %s217, %s219
      %p223 = scmp.eq.s32.totalorder %s33, 0
      %p224 = por %p222, %p223
      %p225 = scmp.ne.s32.totalorder %s217, %s219
      %p226 = scmp.eq.s32.totalorder %s38, 1
      %p227 = por %p225, %p226
      %p228 = scmp.ne.s32.totalorder %s219, %s220
      %p229 = scmp.eq.s32.totalorder %s38, 0
      %p230 = por %p228, %p229
      %p231 = scmp.ne.s32.totalorder %s219, %s220
      %p232 = scmp.eq.s32.totalorder %s39, 1
      %p233 = por %p231, %p232
      %p235 = scmp.ne.s32.totalorder %s220, %s234
      %p236 = scmp.eq.s32.totalorder %s39, 0
      %p237 = por %p235, %p236
      %s239 = sadd.s32 %s238, 1
      %p242 = scmp.eq.s32.totalorder %s33, 1
      %p243 = scmp.ne.s32.totalorder %s238, %s240
      %p244 = scmp.eq.s32.totalorder %s33, 0
      %p245 = por %p243, %p244
      %p246 = scmp.ne.s32.totalorder %s238, %s240
      %p247 = scmp.eq.s32.totalorder %s38, 1
      %p248 = por %p246, %p247
      %p249 = scmp.ne.s32.totalorder %s240, %s241
      %p250 = scmp.eq.s32.totalorder %s38, 0
      %p251 = por %p249, %p250
      %p252 = scmp.ne.s32.totalorder %s240, %s241
      %p253 = scmp.eq.s32.totalorder %s39, 1
      %p254 = por %p252, %p253
      %p256 = scmp.ne.s32.totalorder %s241, %s255
      %p257 = scmp.eq.s32.totalorder %s39, 0
      %p258 = por %p256, %p257
      %s260 = sadd.s32 %s259, 1
      %p263 = scmp.eq.s32.totalorder %s33, 1
      %p264 = scmp.ne.s32.totalorder %s259, %s261
      %p265 = scmp.eq.s32.totalorder %s33, 0
      %p266 = por %p264, %p265
      %p267 = scmp.ne.s32.totalorder %s259, %s261
      %p268 = scmp.eq.s32.totalorder %s38, 1
      %p269 = por %p267, %p268
      %p270 = scmp.ne.s32.totalorder %s261, %s262
      %p271 = scmp.eq.s32.totalorder %s38, 0
      %p272 = por %p270, %p271
      %p273 = scmp.ne.s32.totalorder %s261, %s262
      %p274 = scmp.eq.s32.totalorder %s39, 1
      %p275 = por %p273, %p274
      %p277 = scmp.ne.s32.totalorder %s262, %s276
      %p278 = scmp.eq.s32.totalorder %s39, 0
      %p279 = por %p277, %p278
      %s281 = sadd.s32 %s280, 1
      %p284 = scmp.eq.s32.totalorder %s33, 1
      %p285 = scmp.ne.s32.totalorder %s280, %s282
      %p286 = scmp.eq.s32.totalorder %s33, 0
      %p287 = por %p285, %p286
      %p288 = scmp.ne.s32.totalorder %s280, %s282
      %p289 = scmp.eq.s32.totalorder %s38, 1
      %p290 = por %p288, %p289
      %p291 = scmp.ne.s32.totalorder %s282, %s283
      %p292 = scmp.eq.s32.totalorder %s38, 0
      %p293 = por %p291, %p292
      %p294 = scmp.ne.s32.totalorder %s282, %s283
      %p295 = scmp.eq.s32.totalorder %s39, 1
      %p296 = por %p294, %p295
      %p298 = scmp.ne.s32.totalorder %s283, %s297
      %p299 = scmp.eq.s32.totalorder %s39, 0
      %p300 = por %p298, %p299
      %s301 = ssub.s32 %s40, %s52
      %s302 = ssub.s32 %s41, %s48
      %s303 = sor.u32 %s301, %s302
      %p304 = scmp.eq.s32.totalorder %s303, 0
      %s306 = sadd.s32 %s305, 1
      %s307 = scalar_select %p304, %s305, %s306
      %p310 = pneg %p304
      %p311 = scmp.eq.s32.totalorder %s33, 1
      %p312 = por %p310, %p311
      %p313 = scmp.ne.s32.totalorder %s305, %s308
      %p314 = scmp.eq.s32.totalorder %s33, 0
      %p315 = por %p313, %p314
      %p316 = scmp.ne.s32.totalorder %s305, %s308
      %p317 = scmp.eq.s32.totalorder %s38, 1
      %p318 = por %p316, %p317
      %p319 = scmp.ne.s32.totalorder %s308, %s309
      %p320 = scmp.eq.s32.totalorder %s38, 0
      %p321 = por %p319, %p320
      %p322 = scmp.ne.s32.totalorder %s308, %s309
      %p323 = scmp.eq.s32.totalorder %s39, 1
      %p324 = por %p322, %p323
      %p326 = scmp.ne.s32.totalorder %s309, %s325
      %p327 = scmp.eq.s32.totalorder %s39, 0
      %p328 = por %p326, %p327
      %s329 = ssub.s32 %s40, %s52
      %s330 = ssub.s32 %s41, %s48
      %s331 = sor.u32 %s329, %s330
      %p332 = scmp.eq.s32.totalorder %s331, 0
      %s334 = sadd.s32 %s333, 1
      %s335 = scalar_select %p332, %s333, %s334
      %p338 = pneg %p332
      %p339 = scmp.eq.s32.totalorder %s33, 1
      %p340 = por %p338, %p339
      %p341 = scmp.ne.s32.totalorder %s333, %s336
      %p342 = scmp.eq.s32.totalorder %s33, 0
      %p343 = por %p341, %p342
      %p344 = scmp.ne.s32.totalorder %s333, %s336
      %p345 = scmp.eq.s32.totalorder %s38, 1
      %p346 = por %p344, %p345
      %p347 = scmp.ne.s32.totalorder %s336, %s337
      %p348 = scmp.eq.s32.totalorder %s38, 0
      %p349 = por %p347, %p348
      %p350 = scmp.ne.s32.totalorder %s336, %s337
      %p351 = scmp.eq.s32.totalorder %s39, 1
      %p352 = por %p350, %p351
      %p354 = scmp.ne.s32.totalorder %s337, %s353
      %p355 = scmp.eq.s32.totalorder %s39, 0
      %p356 = por %p354, %p355
      %p357 = scmp.le.s32.totalorder 1, %s33
      %p358 = scmp.lt.s32.totalorder %s33, 3
      %p359 = pnand %p357, %p358
      %p360 = pneg %p359
      // Predicated region
      $region9: #{tpu_custom_call.1} parent=5 // pred_check
        _
      $region10: #{tpu_custom_call.1} parent=5 // pred_check_branch
        %362 = sbr.rel (%p359) target = $region12
      $region11: #{tpu_custom_call.1} parent=5 // pred_region
        %s363 = ssub.s32 %s33, 1
        // Predicated region
        $region13: #{tpu_custom_call.1} parent=11 // pred_check
          %p364 = pneg %p146
        $region14: #{tpu_custom_call.1} parent=11 // pred_check_branch
          %366 = sbr.rel (%p364) target = $region16
        $region15: #{tpu_custom_call.1} parent=11 // pred_region
          %s368 = ssub.s32 512, 512
          %369 = vsyncadd [#allocation12], %s368
          %s370 = sshll.u32 [#allocation11], 4
          %s371 = int_to_ptr.vmem [resolvable:$true] %s370
          %376 = dma.hbm_to_vmem [thread:$0]  %s3, 512, %s371, [#allocation12], 128, 128, 8
        $region16: #{tpu_custom_call.1} parent=11 // pred_fallthru
          _
        // Predicated region
        $region17: #{tpu_custom_call.1} parent=11 // pred_check
          %p377 = pneg %p167
        $region18: #{tpu_custom_call.1} parent=11 // pred_check_branch
          %379 = sbr.rel (%p377) target = $region20
        $region19: #{tpu_custom_call.1} parent=11 // pred_region
          _
        $region20: #{tpu_custom_call.1} parent=11 // pred_fallthru
          _
        // Predicated region
        $region21: #{tpu_custom_call.1} parent=11 // pred_check
          %p380 = pneg %p188
        $region22: #{tpu_custom_call.1} parent=11 // pred_check_branch
          %382 = sbr.rel (%p380) target = $region24
        $region23: #{tpu_custom_call.1} parent=11 // pred_region
          %s384 = ssub.s32 512, 512
          %385 = vsyncadd [#allocation12], %s384
          %s386 = sshll.u32 [#allocation13], 4
          %s387 = int_to_ptr.vmem [resolvable:$true] %s386
          %392 = dma.hbm_to_vmem [thread:$0]  %s5, 512, %s387, [#allocation12], 128, 128, 8
        $region24: #{tpu_custom_call.1} parent=11 // pred_fallthru
          _
        // Predicated region
        $region25: #{tpu_custom_call.1} parent=11 // pred_check
          %p393 = pneg %p209
        $region26: #{tpu_custom_call.1} parent=11 // pred_check_branch
          %395 = sbr.rel (%p393) target = $region28
        $region27: #{tpu_custom_call.1} parent=11 // pred_region
          _
        $region28: #{tpu_custom_call.1} parent=11 // pred_fallthru
          _
        // Predicated region
        $region29: #{tpu_custom_call.1} parent=11 // pred_check
          %p396 = pneg %p230
        $region30: #{tpu_custom_call.1} parent=11 // pred_check_branch
          %398 = sbr.rel (%p396) target = $region32
        $region31: #{tpu_custom_call.1} parent=11 // pred_region
          %s400 = ssub.s32 512, 512
          %401 = vsyncadd [#allocation15], %s400
          %s402 = sshll.u32 [#allocation14], 4
          %s403 = int_to_ptr.vmem [resolvable:$true] %s402
          %408 = dma.hbm_to_vmem [thread:$0]  %s7, 512, %s403, [#allocation15], 128, 128, 8
        $region32: #{tpu_custom_call.1} parent=11 // pred_fallthru
          _
        // Predicated region
        $region33: #{tpu_custom_call.1} parent=11 // pred_check
          %p409 = pneg %p251
        $region34: #{tpu_custom_call.1} parent=11 // pred_check_branch
          %411 = sbr.rel (%p409) target = $region36
        $region35: #{tpu_custom_call.1} parent=11 // pred_region
          %s413 = ssub.s32 16, 16
          %414 = vsyncadd [#allocation15], %s413
          %s416 = sshll.u32 [#allocation16], 4
          %s417 = int_to_ptr.vmem [resolvable:$true] %s416
          %419 = dma.hbm_to_vmem [thread:$0]  %s8, 16, %s417, [#allocation15]
        $region36: #{tpu_custom_call.1} parent=11 // pred_fallthru
          _
        // Predicated region
        $region37: #{tpu_custom_call.1} parent=11 // pred_check
          %p420 = pneg %p272
        $region38: #{tpu_custom_call.1} parent=11 // pred_check_branch
          %422 = sbr.rel (%p420) target = $region40
        $region39: #{tpu_custom_call.1} parent=11 // pred_region
          _
        $region40: #{tpu_custom_call.1} parent=11 // pred_fallthru
          _
        // Predicated region
        $region41: #{tpu_custom_call.1} parent=11 // pred_check
          %p423 = pneg %p293
        $region42: #{tpu_custom_call.1} parent=11 // pred_check_branch
          %425 = sbr.rel (%p423) target = $region44
        $region43: #{tpu_custom_call.1} parent=11 // pred_region
          _
        $region44: #{tpu_custom_call.1} parent=11 // pred_fallthru
          _
      $region12: #{tpu_custom_call.1} parent=5 // pred_fallthru
        _
      %p426 = scmp.lt.s32.totalorder %s33, 2
      // Predicated region
      $region45: #{tpu_custom_call.1} parent=5 // pred_check
        %p427 = pneg %p426
      $region46: #{tpu_custom_call.1} parent=5 // pred_check_branch
        %429 = sbr.rel (%p427) target = $region48
      $region47: #{tpu_custom_call.1} parent=5 // pred_region
        // Predicated region
        $region49: #{tpu_custom_call.1} parent=47 // pred_check
          %p430 = pneg %p65
        $region50: #{tpu_custom_call.1} parent=47 // pred_check_branch
          %432 = sbr.rel (%p430) target = $region52
        $region51: #{tpu_custom_call.1} parent=47 // pred_region
          %s433 = sand.u32 %s55, 1
          %s434 = scalar_lea.sflag [#allocation6], %s433
          %s435 = sand.u32 %s55, 1
          %s436 = smul.addr %s435, 8
          %s437 = scalar_lea.vmem [#allocation5], %s436
          %s439 = ssub.s32 128, 128
          %440 = vsyncadd %s434, %s439
          %s441 = smul.addr %s40, 128
          %s442 = scalar_lea.hbm %s0, %s441
          %s444 = sshll.u32 %s437, 4
          %s445 = int_to_ptr.vmem [resolvable:$true] %s444
          %447 = dma.hbm_to_vmem [thread:$0]  %s442, 128, %s445, %s434
        $region52: #{tpu_custom_call.1} parent=47 // pred_fallthru
          _
        // Predicated region
        $region53: #{tpu_custom_call.1} parent=47 // pred_check
          %p448 = pneg %p91
        $region54: #{tpu_custom_call.1} parent=47 // pred_check_branch
          %450 = sbr.rel (%p448) target = $region56
        $region55: #{tpu_custom_call.1} parent=47 // pred_region
          %s451 = sand.u32 %s33, 1
          %s452 = scalar_lea.sflag [#allocation9], %s451
          %s453 = sand.u32 %s81, 1
          %s454 = smul.addr %s453, 8
          %s455 = scalar_lea.vmem [#allocation8], %s454
          %s457 = ssub.s32 128, 128
          %458 = vsyncadd %s452, %s457
          %s459 = smul.addr %s40, 128
          %s460 = scalar_lea.hbm %s1, %s459
          %s462 = sshll.u32 %s455, 4
          %s463 = int_to_ptr.vmem [resolvable:$true] %s462
          %465 = dma.hbm_to_vmem [thread:$0]  %s460, 128, %s463, %s452
        $region56: #{tpu_custom_call.1} parent=47 // pred_fallthru
          _
        // Predicated region
        $region57: #{tpu_custom_call.1} parent=47 // pred_check
          %p466 = pneg %p119
        $region58: #{tpu_custom_call.1} parent=47 // pred_check_branch
          %468 = sbr.rel (%p466) target = $region60
        $region59: #{tpu_custom_call.1} parent=47 // pred_region
          %s469 = sand.u32 %s33, 1
          %s470 = scalar_lea.sflag [#allocation9], %s469
          %s471 = sand.u32 %s109, 1
          %s472 = smul.addr %s471, 8
          %s473 = scalar_lea.vmem [#allocation10], %s472
          %s475 = ssub.s32 128, 128
          %476 = vsyncadd %s470, %s475
          %s477 = sadd.s32 %s41, %s40
          %s478 = smul.addr %s477, 128
          %s479 = scalar_lea.hbm %s2, %s478
          %s481 = sshll.u32 %s473, 4
          %s482 = int_to_ptr.vmem [resolvable:$true] %s481
          %484 = dma.hbm_to_vmem [thread:$0]  %s479, 128, %s482, %s470
        $region60: #{tpu_custom_call.1} parent=47 // pred_fallthru
          _
      $region48: #{tpu_custom_call.1} parent=5 // pred_fallthru
        _
      %p485 = scmp.le.s32.totalorder 1, %s33
      %p486 = scmp.lt.s32.totalorder %s33, 3
      %p487 = pnand %p485, %p486
      %p488 = pneg %p487
      // Predicated region
      $region61: #{tpu_custom_call.1} parent=5 // pred_check
        _
      $region62: #{tpu_custom_call.1} parent=5 // pred_check_branch
        %490 = sbr.rel (%p487) target = $region64
      $region63: #{tpu_custom_call.1} parent=5 // pred_region
        %s491 = ssub.s32 %s33, 1
        %s492 = sand.u32 %s58, 1
        %s493 = scalar_lea.sflag [#allocation6], %s492
        %s494 = sand.u32 %s58, 1
        %s495 = smul.addr %s494, 8
        %s496 = scalar_lea.vmem [#allocation5], %s495
        // Predicated region
        $region65: #{tpu_custom_call.1} parent=63 // pred_check
          %p497 = pneg %p71
        $region66: #{tpu_custom_call.1} parent=63 // pred_check_branch
          %499 = sbr.rel (%p497) target = $region68
        $region67: #{tpu_custom_call.1} parent=63 // pred_region
          %500 = dma.done %s493, 128
        $region68: #{tpu_custom_call.1} parent=63 // pred_fallthru
          _
        %s501 = sand.u32 %s38, 1
        %s502 = scalar_lea.sflag [#allocation9], %s501
        %s503 = sand.u32 %s84, 1
        %s504 = smul.addr %s503, 8
        %s505 = scalar_lea.vmem [#allocation8], %s504
        // Predicated region
        $region69: #{tpu_custom_call.1} parent=63 // pred_check
          %p506 = pneg %p97
        $region70: #{tpu_custom_call.1} parent=63 // pred_check_branch
          %508 = sbr.rel (%p506) target = $region72
        $region71: #{tpu_custom_call.1} parent=63 // pred_region
          %509 = dma.done %s502, 128
        $region72: #{tpu_custom_call.1} parent=63 // pred_fallthru
          _
        %s510 = sand.u32 %s38, 1
        %s511 = scalar_lea.sflag [#allocation9], %s510
        %s512 = sand.u32 %s112, 1
        %s513 = smul.addr %s512, 8
        %s514 = scalar_lea.vmem [#allocation10], %s513
        // Predicated region
        $region73: #{tpu_custom_call.1} parent=63 // pred_check
          %p515 = pneg %p125
        $region74: #{tpu_custom_call.1} parent=63 // pred_check_branch
          %517 = sbr.rel (%p515) target = $region76
        $region75: #{tpu_custom_call.1} parent=63 // pred_region
          %518 = dma.done %s511, 128
        $region76: #{tpu_custom_call.1} parent=63 // pred_fallthru
          _
        // Predicated region
        $region77: #{tpu_custom_call.1} parent=63 // pred_check
          %p519 = pneg %p146
        $region78: #{tpu_custom_call.1} parent=63 // pred_check_branch
          %521 = sbr.rel (%p519) target = $region80
        $region79: #{tpu_custom_call.1} parent=63 // pred_region
          %522 = dma.done [#allocation12], 512
        $region80: #{tpu_custom_call.1} parent=63 // pred_fallthru
          _
        // Predicated region
        $region81: #{tpu_custom_call.1} parent=63 // pred_check
          %p523 = pneg %p188
        $region82: #{tpu_custom_call.1} parent=63 // pred_check_branch
          %525 = sbr.rel (%p523) target = $region84
        $region83: #{tpu_custom_call.1} parent=63 // pred_region
          %526 = dma.done [#allocation12], 512
        $region84: #{tpu_custom_call.1} parent=63 // pred_fallthru
          _
        // Predicated region
        $region85: #{tpu_custom_call.1} parent=63 // pred_check
          %p527 = pneg %p230
        $region86: #{tpu_custom_call.1} parent=63 // pred_check_branch
          %529 = sbr.rel (%p527) target = $region88
        $region87: #{tpu_custom_call.1} parent=63 // pred_region
          %530 = dma.done [#allocation15], 512
        $region88: #{tpu_custom_call.1} parent=63 // pred_fallthru
          _
        // Predicated region
        $region89: #{tpu_custom_call.1} parent=63 // pred_check
          %p531 = pneg %p251
        $region90: #{tpu_custom_call.1} parent=63 // pred_check_branch
          %533 = sbr.rel (%p531) target = $region92
        $region91: #{tpu_custom_call.1} parent=63 // pred_region
          %534 = dma.done [#allocation15], 16
        $region92: #{tpu_custom_call.1} parent=63 // pred_fallthru
          _
        %s535 = sand.u32 %s58, 1
        %s536 = scalar_lea.sflag [#allocation6], %s535
        %s537 = sand.u32 %s58, 1
        %s538 = smul.addr %s537, 8
        %s539 = scalar_lea.vmem [#allocation5], %s538
        %p540 = pneg %p71
        %p541 = pneg %p68
        %s542 = sand.u32 %s38, 1
        %s543 = scalar_lea.sflag [#allocation9], %s542
        %s544 = sand.u32 %s84, 1
        %s545 = smul.addr %s544, 8
        %s546 = scalar_lea.vmem [#allocation8], %s545
        %p547 = pneg %p97
        %p548 = pneg %p94
        %s549 = sand.u32 %s38, 1
        %s550 = scalar_lea.sflag [#allocation9], %s549
        %s551 = sand.u32 %s112, 1
        %s552 = smul.addr %s551, 8
        %s553 = scalar_lea.vmem [#allocation10], %s552
        %p554 = pneg %p125
        %p555 = pneg %p122
        %p556 = pneg %p146
        %p557 = pneg %p143
        %p558 = pneg %p167
        %p559 = pneg %p164
        %p560 = pneg %p188
        %p561 = pneg %p185
        %p562 = pneg %p209
        %p563 = pneg %p206
        %p564 = pneg %p230
        %p565 = pneg %p227
        %p566 = pneg %p251
        %p567 = pneg %p248
        %p568 = pneg %p272
        %p569 = pneg %p269
        %p570 = pneg %p293
        %p571 = pneg %p290
        %p572 = pneg %p321
        %p573 = pneg %p318
        %s574 = sand.u32 %s308, 1
        %s575 = scalar_lea.sflag [#allocation7], %s574
        %s576 = sand.u32 %s308, 1
        %s577 = smul.addr %s576, 8
        %s578 = scalar_lea.vmem [#allocation17], %s577
        %p579 = pneg %p349
        %p580 = pneg %p346
        %s581 = sand.u32 %s336, 1
        %s582 = scalar_lea.sflag [#allocation19], %s581
        %s583 = sand.u32 %s336, 1
        %s584 = smul.addr %s583, 8
        %s585 = scalar_lea.vmem [#allocation18], %s584
        %p586 = scmp.eq.s32.totalorder %s43, 0
        // Predicated region
        $region93: #{tpu_custom_call.1} parent=63 // pred_check
          %p587 = pneg %p586
        $region94: #{tpu_custom_call.1} parent=63 // pred_check_branch
          %589 = sbr.rel (%p587) target = $region96
        $region95: #{tpu_custom_call.1} parent=63 // pred_region
          %v590 = vld [vmem:[%s496] sm:$0xff]
          %v591 = vld [vmem:[#allocation11] sm:$0xff]
          %v592 = vld [vmem:[#allocation11 + $0x8] sm:$0xff]
          %v593 = vld [vmem:[#allocation11 + $0x10] sm:$0xff]
          %v594 = vld [vmem:[#allocation11 + $0x18] sm:$0xff]
          %v595 = vld [vmem:[%s4] sm:$0x1]
          %v597 = vlaneseq
          %v598 = vshrl.u32 %v597, 7
          %v599 = vsub.s32 0, %v598
          %v600 = vrot.slane %v595, %v599
          %vm602 = vcmask 261120
          %v604 = vsel %vm602, %v590, 0
          %606 = vmatprep.subr.mxu0 0.0
          %607 = vmatpush1.msra.mxu0 %v591
          %608 = vmatprep.subr.mxu0 0.0
          %609 = vmatpush1.msra.mxu0 %v592
          %610 = vmatprep.subr.mxu0 0.0
          %611 = vmatpush1.msra.mxu0 %v593
          %612 = vmatprep.subr.mxu0 0.0
          %613 = vmatpush1.msra.mxu0 %v594
          %614 = vmatprep.subr.mxu0 0.0
          %615 = vmatpush1.msra.mxu0 0.0
          %616 = vmatprep.subr.mxu0 0.0
          %617 = vmatpush1.msra.mxu0 0.0
          %618 = vmatprep.subr.mxu0 0.0
          %619 = vmatpush1.msra.mxu0 0.0
          %620 = vmatprep.subr.mxu0 0.0
          %621 = vmatpush1.msra.mxu0 0.0
          %622 = vmatprep.subr.mxu0 0.0
          %623 = vmatpush1.msra.mxu0 0.0
          %624 = vmatprep.subr.mxu0 0.0
          %625 = vmatpush1.msra.mxu0 0.0
          %626 = vmatprep.subr.mxu0 0.0
          %627 = vmatpush1.msra.mxu0 0.0
          %628 = vmatprep.subr.mxu0 0.0
          %629 = vmatpush1.msra.mxu0 0.0
          %630 = vmatprep.subr.mxu0 0.0
          %631 = vmatpush1.msra.mxu0 0.0
          %632 = vmatprep.subr.mxu0 0.0
          %633 = vmatpush1.msra.mxu0 0.0
          %634 = vmatprep.subr.mxu0 0.0
          %635 = vmatpush1.msra.mxu0 0.0
          %636 = vmatprep.subr.mxu0 0.0
          %637 = vmatpush1.msra.mxu0 0.0
          %638 = vmatprep.subr.mxu0 0.0
          %639 = vmatpush1.msra.mxu0 0.0
          %640 = vmatprep.subr.mxu0 0.0
          %641 = vmatpush1.msra.mxu0 0.0
          %642 = vmatprep.subr.mxu0 0.0
          %643 = vmatpush1.msra.mxu0 0.0
          %644 = vmatprep.subr.mxu0 0.0
          %645 = vmatpush1.msra.mxu0 0.0
          %646 = vmatprep.subr.mxu0 0.0
          %647 = vmatpush1.msra.mxu0 0.0
          %648 = vmatprep.subr.mxu0 0.0
          %649 = vmatpush1.msra.mxu0 0.0
          %650 = vmatprep.subr.mxu0 0.0
          %651 = vmatpush1.msra.mxu0 0.0
          %652 = vmatprep.subr.mxu0 0.0
          %653 = vmatpush1.msra.mxu0 0.0
          %654 = vmatprep.subr.mxu0 0.0
          %655 = vmatpush1.msra.mxu0 0.0
          %656 = vmatprep.subr.mxu0 0.0
          %657 = vmatpush1.msra.mxu0 0.0
          %658 = vmatprep.subr.mxu0 0.0
          %659 = vmatpush1.msra.mxu0 0.0
          %660 = vmatprep.subr.mxu0 0.0
          %661 = vmatpush1.msra.mxu0 0.0
          %662 = vmatprep.subr.mxu0 0.0
          %663 = vmatpush1.msra.mxu0 0.0
          %664 = vmatprep.subr.mxu0 0.0
          %665 = vmatpush1.msra.mxu0 0.0
          %666 = vmatprep.subr.mxu0 0.0
          %667 = vmatpush1.msra.mxu0 0.0
          %668 = vmatprep.subr.mxu0 0.0
          %669 = vmatpush1.msra.mxu0 0.0
          %670 = vmatprep.mubr.f32.mxu0 0.0
          %671 = vmatmul.mubr.f32.gmra.mrb[0].mxu0 %v604
          %v672 = vpop.f32.mrb[0].mxu0
          %v673 = vadd.f32 %v600, %v672
          %v674 = vpop.f32.mrb[0].mxu0
          %675 = vdwg.mxu0
          %v676 = vld [vmem:[%s505] sm:$0xff]
          %v677 = vld [vmem:[#allocation13] sm:$0xff]
          %v678 = vld [vmem:[#allocation13 + $0x8] sm:$0xff]
          %v679 = vld [vmem:[#allocation13 + $0x10] sm:$0xff]
          %v680 = vld [vmem:[#allocation13 + $0x18] sm:$0xff]
          %v681 = vld [vmem:[%s6] sm:$0x1]
          %v683 = vlaneseq
          %v684 = vshrl.u32 %v683, 7
          %v685 = vsub.s32 0, %v684
          %v686 = vrot.slane %v681, %v685
          %v689 = vsel %vm602, %v676, 0
          %691 = vmatprep.subr.mxu0 0.0
          %692 = vmatpush1.msra.mxu0 %v677
          %693 = vmatprep.subr.mxu0 0.0
          %694 = vmatpush1.msra.mxu0 %v678
          %695 = vmatprep.subr.mxu0 0.0
          %696 = vmatpush1.msra.mxu0 %v679
          %697 = vmatprep.subr.mxu0 0.0
          %698 = vmatpush1.msra.mxu0 %v680
          %699 = vmatprep.subr.mxu0 0.0
          %700 = vmatpush1.msra.mxu0 0.0
          %701 = vmatprep.subr.mxu0 0.0
          %702 = vmatpush1.msra.mxu0 0.0
          %703 = vmatprep.subr.mxu0 0.0
          %704 = vmatpush1.msra.mxu0 0.0
          %705 = vmatprep.subr.mxu0 0.0
          %706 = vmatpush1.msra.mxu0 0.0
          %707 = vmatprep.subr.mxu0 0.0
          %708 = vmatpush1.msra.mxu0 0.0
          %709 = vmatprep.subr.mxu0 0.0
          %710 = vmatpush1.msra.mxu0 0.0
          %711 = vmatprep.subr.mxu0 0.0
          %712 = vmatpush1.msra.mxu0 0.0
          %713 = vmatprep.subr.mxu0 0.0
          %714 = vmatpush1.msra.mxu0 0.0
          %715 = vmatprep.subr.mxu0 0.0
          %716 = vmatpush1.msra.mxu0 0.0
          %717 = vmatprep.subr.mxu0 0.0
          %718 = vmatpush1.msra.mxu0 0.0
          %719 = vmatprep.subr.mxu0 0.0
          %720 = vmatpush1.msra.mxu0 0.0
          %721 = vmatprep.subr.mxu0 0.0
          %722 = vmatpush1.msra.mxu0 0.0
          %723 = vmatprep.subr.mxu0 0.0
          %724 = vmatpush1.msra.mxu0 0.0
          %725 = vmatprep.subr.mxu0 0.0
          %726 = vmatpush1.msra.mxu0 0.0
          %727 = vmatprep.subr.mxu0 0.0
          %728 = vmatpush1.msra.mxu0 0.0
          %729 = vmatprep.subr.mxu0 0.0
          %730 = vmatpush1.msra.mxu0 0.0
          %731 = vmatprep.subr.mxu0 0.0
          %732 = vmatpush1.msra.mxu0 0.0
          %733 = vmatprep.subr.mxu0 0.0
          %734 = vmatpush1.msra.mxu0 0.0
          %735 = vmatprep.subr.mxu0 0.0
          %736 = vmatpush1.msra.mxu0 0.0
          %737 = vmatprep.subr.mxu0 0.0
          %738 = vmatpush1.msra.mxu0 0.0
          %739 = vmatprep.subr.mxu0 0.0
          %740 = vmatpush1.msra.mxu0 0.0
          %741 = vmatprep.subr.mxu0 0.0
          %742 = vmatpush1.msra.mxu0 0.0
          %743 = vmatprep.subr.mxu0 0.0
          %744 = vmatpush1.msra.mxu0 0.0
          %745 = vmatprep.subr.mxu0 0.0
          %746 = vmatpush1.msra.mxu0 0.0
          %747 = vmatprep.subr.mxu0 0.0
          %748 = vmatpush1.msra.mxu0 0.0
          %749 = vmatprep.subr.mxu0 0.0
          %750 = vmatpush1.msra.mxu0 0.0
          %751 = vmatprep.subr.mxu0 0.0
          %752 = vmatpush1.msra.mxu0 0.0
          %753 = vmatprep.subr.mxu0 0.0
          %754 = vmatpush1.msra.mxu0 0.0
          %755 = vmatprep.mubr.f32.mxu0 0.0
          %756 = vmatmul.mubr.f32.gmra.mrb[0].mxu0 %v689
          %v757 = vpop.f32.mrb[0].mxu0
          %v758 = vadd.f32 %v686, %v757
          %v759 = vpop.f32.mrb[0].mxu0
          %760 = vdwg.mxu0
          %761 = vst.msk [vmem:[#allocation2] sm:$0xff] %vm602, %v673
          %762 = vst.msk [vmem:[#allocation3] sm:$0xff] %vm602, %v758
        $region96: #{tpu_custom_call.1} parent=63 // pred_fallthru
          _
        %v763 = vld [vmem:[%s514] sm:$0xff]
        %v764 = vld [vmem:[#allocation14] sm:$0xff]
        %v765 = vld [vmem:[#allocation14 + $0x8] sm:$0xff]
        %v766 = vld [vmem:[#allocation14 + $0x10] sm:$0xff]
        %v767 = vld [vmem:[#allocation14 + $0x18] sm:$0xff]
        %v768 = vld [vmem:[#allocation16] sm:$0x1]
        %v770 = vlaneseq
        %v771 = vshrl.u32 %v770, 7
        %v772 = vsub.s32 0, %v771
        %v773 = vrot.slane %v768, %v772
        %vm775 = vcmask 261120
        %v777 = vsel %vm775, %v763, 0
        %779 = vmatprep.subr.mxu0 0.0
        %780 = vmatpush1.msra.mxu0 %v764
        %781 = vmatprep.subr.mxu0 0.0
        %782 = vmatpush1.msra.mxu0 %v765
        %783 = vmatprep.subr.mxu0 0.0
        %784 = vmatpush1.msra.mxu0 %v766
        %785 = vmatprep.subr.mxu0 0.0
        %786 = vmatpush1.msra.mxu0 %v767
        %787 = vmatprep.subr.mxu0 0.0
        %788 = vmatpush1.msra.mxu0 0.0
        %789 = vmatprep.subr.mxu0 0.0
        %790 = vmatpush1.msra.mxu0 0.0
        %791 = vmatprep.subr.mxu0 0.0
        %792 = vmatpush1.msra.mxu0 0.0
        %793 = vmatprep.subr.mxu0 0.0
        %794 = vmatpush1.msra.mxu0 0.0
        %795 = vmatprep.subr.mxu0 0.0
        %796 = vmatpush1.msra.mxu0 0.0
        %797 = vmatprep.subr.mxu0 0.0
        %798 = vmatpush1.msra.mxu0 0.0
        %799 = vmatprep.subr.mxu0 0.0
        %800 = vmatpush1.msra.mxu0 0.0
        %801 = vmatprep.subr.mxu0 0.0
        %802 = vmatpush1.msra.mxu0 0.0
        %803 = vmatprep.subr.mxu0 0.0
        %804 = vmatpush1.msra.mxu0 0.0
        %805 = vmatprep.subr.mxu0 0.0
        %806 = vmatpush1.msra.mxu0 0.0
        %807 = vmatprep.subr.mxu0 0.0
        %808 = vmatpush1.msra.mxu0 0.0
        %809 = vmatprep.subr.mxu0 0.0
        %810 = vmatpush1.msra.mxu0 0.0
        %811 = vmatprep.subr.mxu0 0.0
        %812 = vmatpush1.msra.mxu0 0.0
        %813 = vmatprep.subr.mxu0 0.0
        %814 = vmatpush1.msra.mxu0 0.0
        %815 = vmatprep.subr.mxu0 0.0
        %816 = vmatpush1.msra.mxu0 0.0
        %817 = vmatprep.subr.mxu0 0.0
        %818 = vmatpush1.msra.mxu0 0.0
        %819 = vmatprep.subr.mxu0 0.0
        %820 = vmatpush1.msra.mxu0 0.0
        %821 = vmatprep.subr.mxu0 0.0
        %822 = vmatpush1.msra.mxu0 0.0
        %823 = vmatprep.subr.mxu0 0.0
        %824 = vmatpush1.msra.mxu0 0.0
        %825 = vmatprep.subr.mxu0 0.0
        %826 = vmatpush1.msra.mxu0 0.0
        %827 = vmatprep.subr.mxu0 0.0
        %828 = vmatpush1.msra.mxu0 0.0
        %829 = vmatprep.subr.mxu0 0.0
        %830 = vmatpush1.msra.mxu0 0.0
        %831 = vmatprep.subr.mxu0 0.0
        %832 = vmatpush1.msra.mxu0 0.0
        %833 = vmatprep.subr.mxu0 0.0
        %834 = vmatpush1.msra.mxu0 0.0
        %835 = vmatprep.subr.mxu0 0.0
        %836 = vmatpush1.msra.mxu0 0.0
        %837 = vmatprep.subr.mxu0 0.0
        %838 = vmatpush1.msra.mxu0 0.0
        %839 = vmatprep.subr.mxu0 0.0
        %840 = vmatpush1.msra.mxu0 0.0
        %841 = vmatprep.subr.mxu0 0.0
        %842 = vmatpush1.msra.mxu0 0.0
        %843 = vmatprep.mubr.f32.mxu0 0.0
        %844 = vmatmul.mubr.f32.gmra.mrb[0].mxu0 %v777
        %v845 = vpop.f32.mrb[0].mxu0
        %v846 = vadd.f32 %v773, %v845
        %v847 = vpop.f32.mrb[0].mxu0
        %848 = vdwg.mxu0
        %v849 = vld [vmem:[#allocation2] sm:$0xff]
        %v850 = vld [vmem:[#allocation3] sm:$0xff]
        %vm851 = vcmask 64512
        %v853 = vsel %vm851, %v846, 0
        %v856 = vsel %vm851, %v849, 0
        %858 = vmatprep.subr.mxu0 0.0
        %859 = vmatpush1.xpose.msra.mxu0 %v856
        %860 = vmatprep.subr.mxu0 0.0
        %861 = vmatpush1.xpose.msra.mxu0 0.0
        %862 = vmatprep.subr.mxu0 0.0
        %863 = vmatpush1.xpose.msra.mxu0 0.0
        %864 = vmatprep.subr.mxu0 0.0
        %865 = vmatpush1.xpose.msra.mxu0 0.0
        %866 = vmatprep.subr.mxu0 0.0
        %867 = vmatpush1.xpose.msra.mxu0 0.0
        %868 = vmatprep.subr.mxu0 0.0
        %869 = vmatpush1.xpose.msra.mxu0 0.0
        %870 = vmatprep.subr.mxu0 0.0
        %871 = vmatpush1.xpose.msra.mxu0 0.0
        %872 = vmatprep.subr.mxu0 0.0
        %873 = vmatpush1.xpose.msra.mxu0 0.0
        %874 = vmatprep.subr.mxu0 0.0
        %875 = vmatpush1.xpose.msra.mxu0 0.0
        %876 = vmatprep.subr.mxu0 0.0
        %877 = vmatpush1.xpose.msra.mxu0 0.0
        %878 = vmatprep.subr.mxu0 0.0
        %879 = vmatpush1.xpose.msra.mxu0 0.0
        %880 = vmatprep.subr.mxu0 0.0
        %881 = vmatpush1.xpose.msra.mxu0 0.0
        %882 = vmatprep.subr.mxu0 0.0
        %883 = vmatpush1.xpose.msra.mxu0 0.0
        %884 = vmatprep.subr.mxu0 0.0
        %885 = vmatpush1.xpose.msra.mxu0 0.0
        %886 = vmatprep.subr.mxu0 0.0
        %887 = vmatpush1.xpose.msra.mxu0 0.0
        %888 = vmatprep.subr.mxu0 0.0
        %889 = vmatpush1.xpose.msra.mxu0 0.0
        %890 = vmatprep.subr.mxu0 0.0
        %891 = vmatpush1.xpose.msra.mxu0 0.0
        %892 = vmatprep.subr.mxu0 0.0
        %893 = vmatpush1.xpose.msra.mxu0 0.0
        %894 = vmatprep.subr.mxu0 0.0
        %895 = vmatpush1.xpose.msra.mxu0 0.0
        %896 = vmatprep.subr.mxu0 0.0
        %897 = vmatpush1.xpose.msra.mxu0 0.0
        %898 = vmatprep.subr.mxu0 0.0
        %899 = vmatpush1.xpose.msra.mxu0 0.0
        %900 = vmatprep.subr.mxu0 0.0
        %901 = vmatpush1.xpose.msra.mxu0 0.0
        %902 = vmatprep.subr.mxu0 0.0
        %903 = vmatpush1.xpose.msra.mxu0 0.0
        %904 = vmatprep.subr.mxu0 0.0
        %905 = vmatpush1.xpose.msra.mxu0 0.0
        %906 = vmatprep.subr.mxu0 0.0
        %907 = vmatpush1.xpose.msra.mxu0 0.0
        %908 = vmatprep.subr.mxu0 0.0
        %909 = vmatpush1.xpose.msra.mxu0 0.0
        %910 = vmatprep.subr.mxu0 0.0
        %911 = vmatpush1.xpose.msra.mxu0 0.0
        %912 = vmatprep.subr.mxu0 0.0
        %913 = vmatpush1.xpose.msra.mxu0 0.0
        %914 = vmatprep.subr.mxu0 0.0
        %915 = vmatpush1.xpose.msra.mxu0 0.0
        %916 = vmatprep.subr.mxu0 0.0
        %917 = vmatpush1.xpose.msra.mxu0 0.0
        %918 = vmatprep.subr.mxu0 0.0
        %919 = vmatpush1.xpose.msra.mxu0 0.0
        %920 = vmatprep.subr.mxu0 0.0
        %921 = vmatpush1.xpose.msra.mxu0 0.0
        %922 = vmatprep.mubr.f32.mxu0 0.0
        %923 = vmatmul.mubr.f32.gmra.mrb[0].mxu0 %v853
        %v924 = vpop.f32.mrb[0].mxu0
        %v925 = vadd.f32 0.0, %v924
        %v926 = vpop.f32.mrb[0].mxu0
        %927 = vdwg.mxu0
        %v928 = vadd.f32 %v925, 0.0
        %v929 = vsel %vm851, %v925, -inf
        %930 = vmax.xlane.f32.xlu0 %v929
        %v931 = vpop.xlane.xlu0 %930
        %v932 = vsub.f32 %v925, %v931
        %v933 = vmul.f32 %v932, 1.442695
        %v934 = vpow.pop %v933
        %v935 = vsel %vm851, %v934, 0.0
        %936 = vadd.xlane.f32.xlu0 %v935
        %v937 = vpop.xlane.xlu0 %936
        %v938 = vrcp.pop %v937
        %v939 = vmul.f32 %v937, %v938
        %v940 = vsub.f32 2.0, %v939
        %v941 = vmul.f32 %v938, %v940
        %v942 = vmul.f32 %v934, %v941
        %v944 = vsel %vm851, %v942, 0
        %946 = vmatprep.subr.mxu0 0.0
        %947 = vmatpush1.msra.mxu0 %v850
        %948 = vmatprep.subr.mxu0 0.0
        %949 = vmatpush1.msra.mxu0 0.0
        %950 = vmatprep.subr.mxu0 0.0
        %951 = vmatpush1.msra.mxu0 0.0
        %952 = vmatprep.subr.mxu0 0.0
        %953 = vmatpush1.msra.mxu0 0.0
        %954 = vmatprep.subr.mxu0 0.0
        %955 = vmatpush1.msra.mxu0 0.0
        %956 = vmatprep.subr.mxu0 0.0
        %957 = vmatpush1.msra.mxu0 0.0
        %958 = vmatprep.subr.mxu0 0.0
        %959 = vmatpush1.msra.mxu0 0.0
        %960 = vmatprep.subr.mxu0 0.0
        %961 = vmatpush1.msra.mxu0 0.0
        %962 = vmatprep.subr.mxu0 0.0
        %963 = vmatpush1.msra.mxu0 0.0
        %964 = vmatprep.subr.mxu0 0.0
        %965 = vmatpush1.msra.mxu0 0.0
        %966 = vmatprep.subr.mxu0 0.0
        %967 = vmatpush1.msra.mxu0 0.0
        %968 = vmatprep.subr.mxu0 0.0
        %969 = vmatpush1.msra.mxu0 0.0
        %970 = vmatprep.subr.mxu0 0.0
        %971 = vmatpush1.msra.mxu0 0.0
        %972 = vmatprep.subr.mxu0 0.0
        %973 = vmatpush1.msra.mxu0 0.0
        %974 = vmatprep.subr.mxu0 0.0
        %975 = vmatpush1.msra.mxu0 0.0
        %976 = vmatprep.subr.mxu0 0.0
        %977 = vmatpush1.msra.mxu0 0.0
        %978 = vmatprep.subr.mxu0 0.0
        %979 = vmatpush1.msra.mxu0 0.0
        %980 = vmatprep.subr.mxu0 0.0
        %981 = vmatpush1.msra.mxu0 0.0
        %982 = vmatprep.subr.mxu0 0.0
        %983 = vmatpush1.msra.mxu0 0.0
        %984 = vmatprep.subr.mxu0 0.0
        %985 = vmatpush1.msra.mxu0 0.0
        %986 = vmatprep.subr.mxu0 0.0
        %987 = vmatpush1.msra.mxu0 0.0
        %988 = vmatprep.subr.mxu0 0.0
        %989 = vmatpush1.msra.mxu0 0.0
        %990 = vmatprep.subr.mxu0 0.0
        %991 = vmatpush1.msra.mxu0 0.0
        %992 = vmatprep.subr.mxu0 0.0
        %993 = vmatpush1.msra.mxu0 0.0
        %994 = vmatprep.subr.mxu0 0.0
        %995 = vmatpush1.msra.mxu0 0.0
        %996 = vmatprep.subr.mxu0 0.0
        %997 = vmatpush1.msra.mxu0 0.0
        %998 = vmatprep.subr.mxu0 0.0
        %999 = vmatpush1.msra.mxu0 0.0
        %1000 = vmatprep.subr.mxu0 0.0
        %1001 = vmatpush1.msra.mxu0 0.0
        %1002 = vmatprep.subr.mxu0 0.0
        %1003 = vmatpush1.msra.mxu0 0.0
        %1004 = vmatprep.subr.mxu0 0.0
        %1005 = vmatpush1.msra.mxu0 0.0
        %1006 = vmatprep.subr.mxu0 0.0
        %1007 = vmatpush1.msra.mxu0 0.0
        %1008 = vmatprep.subr.mxu0 0.0
        %1009 = vmatpush1.msra.mxu0 0.0
        %1010 = vmatprep.mubr.f32.mxu0 0.0
        %1011 = vmatmul.mubr.f32.gmra.mrb[0].mxu0 %v944
        %v1012 = vpop.f32.mrb[0].mxu0
        %v1013 = vadd.f32 0.0, %v1012
        %v1014 = vpop.f32.mrb[0].mxu0
        %1015 = vdwg.mxu0
        %1016 = vst.msk [vmem:[#allocation4] sm:$0xff] %vm851, %v1013
        %v1017 = vld [vmem:[#allocation2] sm:$0xff]
        %v1018 = vld [vmem:[#allocation3] sm:$0xff]
        %1019 = vrot.lane.b32.xlu0 %v846, 120
        %v1020 = vpop.permute.xlu0 %1019
        %1022 = vrot.lane.b32.xlu0 %v1017, 120
        %v1023 = vpop.permute.xlu0 %1022
        %v1024 = vsel %vm851, %v1020, 0
        %v1026 = vsel %vm851, %v1023, 0
        %1028 = vmatprep.subr.mxu0 0.0
        %1029 = vmatpush1.xpose.msra.mxu0 %v1026
        %1030 = vmatprep.subr.mxu0 0.0
        %1031 = vmatpush1.xpose.msra.mxu0 0.0
        %1032 = vmatprep.subr.mxu0 0.0
        %1033 = vmatpush1.xpose.msra.mxu0 0.0
        %1034 = vmatprep.subr.mxu0 0.0
        %1035 = vmatpush1.xpose.msra.mxu0 0.0
        %1036 = vmatprep.subr.mxu0 0.0
        %1037 = vmatpush1.xpose.msra.mxu0 0.0
        %1038 = vmatprep.subr.mxu0 0.0
        %1039 = vmatpush1.xpose.msra.mxu0 0.0
        %1040 = vmatprep.subr.mxu0 0.0
        %1041 = vmatpush1.xpose.msra.mxu0 0.0
        %1042 = vmatprep.subr.mxu0 0.0
        %1043 = vmatpush1.xpose.msra.mxu0 0.0
        %1044 = vmatprep.subr.mxu0 0.0
        %1045 = vmatpush1.xpose.msra.mxu0 0.0
        %1046 = vmatprep.subr.mxu0 0.0
        %1047 = vmatpush1.xpose.msra.mxu0 0.0
        %1048 = vmatprep.subr.mxu0 0.0
        %1049 = vmatpush1.xpose.msra.mxu0 0.0
        %1050 = vmatprep.subr.mxu0 0.0
        %1051 = vmatpush1.xpose.msra.mxu0 0.0
        %1052 = vmatprep.subr.mxu0 0.0
        %1053 = vmatpush1.xpose.msra.mxu0 0.0
        %1054 = vmatprep.subr.mxu0 0.0
        %1055 = vmatpush1.xpose.msra.mxu0 0.0
        %1056 = vmatprep.subr.mxu0 0.0
        %1057 = vmatpush1.xpose.msra.mxu0 0.0
        %1058 = vmatprep.subr.mxu0 0.0
        %1059 = vmatpush1.xpose.msra.mxu0 0.0
        %1060 = vmatprep.subr.mxu0 0.0
        %1061 = vmatpush1.xpose.msra.mxu0 0.0
        %1062 = vmatprep.subr.mxu0 0.0
        %1063 = vmatpush1.xpose.msra.mxu0 0.0
        %1064 = vmatprep.subr.mxu0 0.0
        %1065 = vmatpush1.xpose.msra.mxu0 0.0
        %1066 = vmatprep.subr.mxu0 0.0
        %1067 = vmatpush1.xpose.msra.mxu0 0.0
        %1068 = vmatprep.subr.mxu0 0.0
        %1069 = vmatpush1.xpose.msra.mxu0 0.0
        %1070 = vmatprep.subr.mxu0 0.0
        %1071 = vmatpush1.xpose.msra.mxu0 0.0
        %1072 = vmatprep.subr.mxu0 0.0
        %1073 = vmatpush1.xpose.msra.mxu0 0.0
        %1074 = vmatprep.subr.mxu0 0.0
        %1075 = vmatpush1.xpose.msra.mxu0 0.0
        %1076 = vmatprep.subr.mxu0 0.0
        %1077 = vmatpush1.xpose.msra.mxu0 0.0
        %1078 = vmatprep.subr.mxu0 0.0
        %1079 = vmatpush1.xpose.msra.mxu0 0.0
        %1080 = vmatprep.subr.mxu0 0.0
        %1081 = vmatpush1.xpose.msra.mxu0 0.0
        %1082 = vmatprep.subr.mxu0 0.0
        %1083 = vmatpush1.xpose.msra.mxu0 0.0
        %1084 = vmatprep.subr.mxu0 0.0
        %1085 = vmatpush1.xpose.msra.mxu0 0.0
        %1086 = vmatprep.subr.mxu0 0.0
        %1087 = vmatpush1.xpose.msra.mxu0 0.0
        %1088 = vmatprep.subr.mxu0 0.0
        %1089 = vmatpush1.xpose.msra.mxu0 0.0
        %1090 = vmatprep.subr.mxu0 0.0
        %1091 = vmatpush1.xpose.msra.mxu0 0.0
        %1092 = vmatprep.mubr.f32.mxu0 0.0
        %1093 = vmatmul.mubr.f32.gmra.mrb[0].mxu0 %v1024
        %v1094 = vpop.f32.mrb[0].mxu0
        %v1095 = vadd.f32 0.0, %v1094
        %v1096 = vpop.f32.mrb[0].mxu0
        %1097 = vdwg.mxu0
        %v1098 = vadd.f32 %v928, %v1095
        %v1099 = vsel %vm851, %v1095, -inf
        %1100 = vmax.xlane.f32.xlu0 %v1099
        %v1101 = vpop.xlane.xlu0 %1100
        %v1102 = vsub.f32 %v1095, %v1101
        %v1103 = vmul.f32 %v1102, 1.442695
        %v1104 = vpow.pop %v1103
        %v1105 = vsel %vm851, %v1104, 0.0
        %1106 = vadd.xlane.f32.xlu0 %v1105
        %v1107 = vpop.xlane.xlu0 %1106
        %v1108 = vrcp.pop %v1107
        %v1109 = vmul.f32 %v1107, %v1108
        %v1110 = vsub.f32 2.0, %v1109
        %v1111 = vmul.f32 %v1108, %v1110
        %v1112 = vmul.f32 %v1104, %v1111
        %1114 = vrot.lane.b32.xlu0 %v1018, 120
        %v1115 = vpop.permute.xlu0 %1114
        %v1118 = vsel %vm851, %v1112, 0
        %1120 = vmatprep.subr.mxu0 0.0
        %1121 = vmatpush1.msra.mxu0 %v1115
        %1122 = vmatprep.subr.mxu0 0.0
        %1123 = vmatpush1.msra.mxu0 0.0
        %1124 = vmatprep.subr.mxu0 0.0
        %1125 = vmatpush1.msra.mxu0 0.0
        %1126 = vmatprep.subr.mxu0 0.0
        %1127 = vmatpush1.msra.mxu0 0.0
        %1128 = vmatprep.subr.mxu0 0.0
        %1129 = vmatpush1.msra.mxu0 0.0
        %1130 = vmatprep.subr.mxu0 0.0
        %1131 = vmatpush1.msra.mxu0 0.0
        %1132 = vmatprep.subr.mxu0 0.0
        %1133 = vmatpush1.msra.mxu0 0.0
        %1134 = vmatprep.subr.mxu0 0.0
        %1135 = vmatpush1.msra.mxu0 0.0
        %1136 = vmatprep.subr.mxu0 0.0
        %1137 = vmatpush1.msra.mxu0 0.0
        %1138 = vmatprep.subr.mxu0 0.0
        %1139 = vmatpush1.msra.mxu0 0.0
        %1140 = vmatprep.subr.mxu0 0.0
        %1141 = vmatpush1.msra.mxu0 0.0
        %1142 = vmatprep.subr.mxu0 0.0
        %1143 = vmatpush1.msra.mxu0 0.0
        %1144 = vmatprep.subr.mxu0 0.0
        %1145 = vmatpush1.msra.mxu0 0.0
        %1146 = vmatprep.subr.mxu0 0.0
        %1147 = vmatpush1.msra.mxu0 0.0
        %1148 = vmatprep.subr.mxu0 0.0
        %1149 = vmatpush1.msra.mxu0 0.0
        %1150 = vmatprep.subr.mxu0 0.0
        %1151 = vmatpush1.msra.mxu0 0.0
        %1152 = vmatprep.subr.mxu0 0.0
        %1153 = vmatpush1.msra.mxu0 0.0
        %1154 = vmatprep.subr.mxu0 0.0
        %1155 = vmatpush1.msra.mxu0 0.0
        %1156 = vmatprep.subr.mxu0 0.0
        %1157 = vmatpush1.msra.mxu0 0.0
        %1158 = vmatprep.subr.mxu0 0.0
        %1159 = vmatpush1.msra.mxu0 0.0
        %1160 = vmatprep.subr.mxu0 0.0
        %1161 = vmatpush1.msra.mxu0 0.0
        %1162 = vmatprep.subr.mxu0 0.0
        %1163 = vmatpush1.msra.mxu0 0.0
        %1164 = vmatprep.subr.mxu0 0.0
        %1165 = vmatpush1.msra.mxu0 0.0
        %1166 = vmatprep.subr.mxu0 0.0
        %1167 = vmatpush1.msra.mxu0 0.0
        %1168 = vmatprep.subr.mxu0 0.0
        %1169 = vmatpush1.msra.mxu0 0.0
        %1170 = vmatprep.subr.mxu0 0.0
        %1171 = vmatpush1.msra.mxu0 0.0
        %1172 = vmatprep.subr.mxu0 0.0
        %1173 = vmatpush1.msra.mxu0 0.0
        %1174 = vmatprep.subr.mxu0 0.0
        %1175 = vmatpush1.msra.mxu0 0.0
        %1176 = vmatprep.subr.mxu0 0.0
        %1177 = vmatpush1.msra.mxu0 0.0
        %1178 = vmatprep.subr.mxu0 0.0
        %1179 = vmatpush1.msra.mxu0 0.0
        %1180 = vmatprep.subr.mxu0 0.0
        %1181 = vmatpush1.msra.mxu0 0.0
        %1182 = vmatprep.subr.mxu0 0.0
        %1183 = vmatpush1.msra.mxu0 0.0
        %1184 = vmatprep.mubr.f32.mxu0 0.0
        %1185 = vmatmul.mubr.f32.gmra.mrb[0].mxu0 %v1118
        %v1186 = vpop.f32.mrb[0].mxu0
        %v1187 = vadd.f32 0.0, %v1186
        %v1188 = vpop.f32.mrb[0].mxu0
        %1189 = vdwg.mxu0
        %1191 = vrot.lane.b32.xlu0 %v1187, 8
        %v1192 = vpop.permute.xlu0 %1191
        %vm1194 = vcmask 130112
        %1195 = vst.msk [vmem:[#allocation4] sm:$0xff] %vm1194, %v1192
        %v1196 = vld [vmem:[#allocation2] sm:$0xff]
        %v1197 = vld [vmem:[#allocation3] sm:$0xff]
        %1198 = vrot.lane.b32.xlu0 %v846, 112
        %v1199 = vpop.permute.xlu0 %1198
        %1201 = vrot.lane.b32.xlu0 %v1196, 112
        %v1202 = vpop.permute.xlu0 %1201
        %v1203 = vsel %vm851, %v1199, 0
        %v1205 = vsel %vm851, %v1202, 0
        %1207 = vmatprep.subr.mxu0 0.0
        %1208 = vmatpush1.xpose.msra.mxu0 %v1205
        %1209 = vmatprep.subr.mxu0 0.0
        %1210 = vmatpush1.xpose.msra.mxu0 0.0
        %1211 = vmatprep.subr.mxu0 0.0
        %1212 = vmatpush1.xpose.msra.mxu0 0.0
        %1213 = vmatprep.subr.mxu0 0.0
        %1214 = vmatpush1.xpose.msra.mxu0 0.0
        %1215 = vmatprep.subr.mxu0 0.0
        %1216 = vmatpush1.xpose.msra.mxu0 0.0
        %1217 = vmatprep.subr.mxu0 0.0
        %1218 = vmatpush1.xpose.msra.mxu0 0.0
        %1219 = vmatprep.subr.mxu0 0.0
        %1220 = vmatpush1.xpose.msra.mxu0 0.0
        %1221 = vmatprep.subr.mxu0 0.0
        %1222 = vmatpush1.xpose.msra.mxu0 0.0
        %1223 = vmatprep.subr.mxu0 0.0
        %1224 = vmatpush1.xpose.msra.mxu0 0.0
        %1225 = vmatprep.subr.mxu0 0.0
        %1226 = vmatpush1.xpose.msra.mxu0 0.0
        %1227 = vmatprep.subr.mxu0 0.0
        %1228 = vmatpush1.xpose.msra.mxu0 0.0
        %1229 = vmatprep.subr.mxu0 0.0
        %1230 = vmatpush1.xpose.msra.mxu0 0.0
        %1231 = vmatprep.subr.mxu0 0.0
        %1232 = vmatpush1.xpose.msra.mxu0 0.0
        %1233 = vmatprep.subr.mxu0 0.0
        %1234 = vmatpush1.xpose.msra.mxu0 0.0
        %1235 = vmatprep.subr.mxu0 0.0
        %1236 = vmatpush1.xpose.msra.mxu0 0.0
        %1237 = vmatprep.subr.mxu0 0.0
        %1238 = vmatpush1.xpose.msra.mxu0 0.0
        %1239 = vmatprep.subr.mxu0 0.0
        %1240 = vmatpush1.xpose.msra.mxu0 0.0
        %1241 = vmatprep.subr.mxu0 0.0
        %1242 = vmatpush1.xpose.msra.mxu0 0.0
        %1243 = vmatprep.subr.mxu0 0.0
        %1244 = vmatpush1.xpose.msra.mxu0 0.0
        %1245 = vmatprep.subr.mxu0 0.0
        %1246 = vmatpush1.xpose.msra.mxu0 0.0
        %1247 = vmatprep.subr.mxu0 0.0
        %1248 = vmatpush1.xpose.msra.mxu0 0.0
        %1249 = vmatprep.subr.mxu0 0.0
        %1250 = vmatpush1.xpose.msra.mxu0 0.0
        %1251 = vmatprep.subr.mxu0 0.0
        %1252 = vmatpush1.xpose.msra.mxu0 0.0
        %1253 = vmatprep.subr.mxu0 0.0
        %1254 = vmatpush1.xpose.msra.mxu0 0.0
        %1255 = vmatprep.subr.mxu0 0.0
        %1256 = vmatpush1.xpose.msra.mxu0 0.0
        %1257 = vmatprep.subr.mxu0 0.0
        %1258 = vmatpush1.xpose.msra.mxu0 0.0
        %1259 = vmatprep.subr.mxu0 0.0
        %1260 = vmatpush1.xpose.msra.mxu0 0.0
        %1261 = vmatprep.subr.mxu0 0.0
        %1262 = vmatpush1.xpose.msra.mxu0 0.0
        %1263 = vmatprep.subr.mxu0 0.0
        %1264 = vmatpush1.xpose.msra.mxu0 0.0
        %1265 = vmatprep.subr.mxu0 0.0
        %1266 = vmatpush1.xpose.msra.mxu0 0.0
        %1267 = vmatprep.subr.mxu0 0.0
        %1268 = vmatpush1.xpose.msra.mxu0 0.0
        %1269 = vmatprep.subr.mxu0 0.0
        %1270 = vmatpush1.xpose.msra.mxu0 0.0
        %1271 = vmatprep.mubr.f32.mxu0 0.0
        %1272 = vmatmul.mubr.f32.gmra.mrb[0].mxu0 %v1203
        %v1273 = vpop.f32.mrb[0].mxu0
        %v1274 = vadd.f32 0.0, %v1273
        %v1275 = vpop.f32.mrb[0].mxu0
        %1276 = vdwg.mxu0
        %v1277 = vadd.f32 %v1098, %v1274
        %v1278 = vsel %vm851, %v1274, -inf
        %1279 = vmax.xlane.f32.xlu0 %v1278
        %v1280 = vpop.xlane.xlu0 %1279
        %v1281 = vsub.f32 %v1274, %v1280
        %v1282 = vmul.f32 %v1281, 1.442695
        %v1283 = vpow.pop %v1282
        %v1284 = vsel %vm851, %v1283, 0.0
        %1285 = vadd.xlane.f32.xlu0 %v1284
        %v1286 = vpop.xlane.xlu0 %1285
        %v1287 = vrcp.pop %v1286
        %v1288 = vmul.f32 %v1286, %v1287
        %v1289 = vsub.f32 2.0, %v1288
        %v1290 = vmul.f32 %v1287, %v1289
        %v1291 = vmul.f32 %v1283, %v1290
        %1293 = vrot.lane.b32.xlu0 %v1197, 112
        %v1294 = vpop.permute.xlu0 %1293
        %v1297 = vsel %vm851, %v1291, 0
        %1299 = vmatprep.subr.mxu0 0.0
        %1300 = vmatpush1.msra.mxu0 %v1294
        %1301 = vmatprep.subr.mxu0 0.0
        %1302 = vmatpush1.msra.mxu0 0.0
        %1303 = vmatprep.subr.mxu0 0.0
        %1304 = vmatpush1.msra.mxu0 0.0
        %1305 = vmatprep.subr.mxu0 0.0
        %1306 = vmatpush1.msra.mxu0 0.0
        %1307 = vmatprep.subr.mxu0 0.0
        %1308 = vmatpush1.msra.mxu0 0.0
        %1309 = vmatprep.subr.mxu0 0.0
        %1310 = vmatpush1.msra.mxu0 0.0
        %1311 = vmatprep.subr.mxu0 0.0
        %1312 = vmatpush1.msra.mxu0 0.0
        %1313 = vmatprep.subr.mxu0 0.0
        %1314 = vmatpush1.msra.mxu0 0.0
        %1315 = vmatprep.subr.mxu0 0.0
        %1316 = vmatpush1.msra.mxu0 0.0
        %1317 = vmatprep.subr.mxu0 0.0
        %1318 = vmatpush1.msra.mxu0 0.0
        %1319 = vmatprep.subr.mxu0 0.0
        %1320 = vmatpush1.msra.mxu0 0.0
        %1321 = vmatprep.subr.mxu0 0.0
        %1322 = vmatpush1.msra.mxu0 0.0
        %1323 = vmatprep.subr.mxu0 0.0
        %1324 = vmatpush1.msra.mxu0 0.0
        %1325 = vmatprep.subr.mxu0 0.0
        %1326 = vmatpush1.msra.mxu0 0.0
        %1327 = vmatprep.subr.mxu0 0.0
        %1328 = vmatpush1.msra.mxu0 0.0
        %1329 = vmatprep.subr.mxu0 0.0
        %1330 = vmatpush1.msra.mxu0 0.0
        %1331 = vmatprep.subr.mxu0 0.0
        %1332 = vmatpush1.msra.mxu0 0.0
        %1333 = vmatprep.subr.mxu0 0.0
        %1334 = vmatpush1.msra.mxu0 0.0
        %1335 = vmatprep.subr.mxu0 0.0
        %1336 = vmatpush1.msra.mxu0 0.0
        %1337 = vmatprep.subr.mxu0 0.0
        %1338 = vmatpush1.msra.mxu0 0.0
        %1339 = vmatprep.subr.mxu0 0.0
        %1340 = vmatpush1.msra.mxu0 0.0
        %1341 = vmatprep.subr.mxu0 0.0
        %1342 = vmatpush1.msra.mxu0 0.0
        %1343 = vmatprep.subr.mxu0 0.0
        %1344 = vmatpush1.msra.mxu0 0.0
        %1345 = vmatprep.subr.mxu0 0.0
        %1346 = vmatpush1.msra.mxu0 0.0
        %1347 = vmatprep.subr.mxu0 0.0
        %1348 = vmatpush1.msra.mxu0 0.0
        %1349 = vmatprep.subr.mxu0 0.0
        %1350 = vmatpush1.msra.mxu0 0.0
        %1351 = vmatprep.subr.mxu0 0.0
        %1352 = vmatpush1.msra.mxu0 0.0
        %1353 = vmatprep.subr.mxu0 0.0
        %1354 = vmatpush1.msra.mxu0 0.0
        %1355 = vmatprep.subr.mxu0 0.0
        %1356 = vmatpush1.msra.mxu0 0.0
        %1357 = vmatprep.subr.mxu0 0.0
        %1358 = vmatpush1.msra.mxu0 0.0
        %1359 = vmatprep.subr.mxu0 0.0
        %1360 = vmatpush1.msra.mxu0 0.0
        %1361 = vmatprep.subr.mxu0 0.0
        %1362 = vmatpush1.msra.mxu0 0.0
        %1363 = vmatprep.mubr.f32.mxu0 0.0
        %1364 = vmatmul.mubr.f32.gmra.mrb[0].mxu0 %v1297
        %v1365 = vpop.f32.mrb[0].mxu0
        %v1366 = vadd.f32 0.0, %v1365
        %v1367 = vpop.f32.mrb[0].mxu0
        %1368 = vdwg.mxu0
        %1370 = vrot.lane.b32.xlu0 %v1366, 16
        %v1371 = vpop.permute.xlu0 %1370
        %vm1373 = vcmask 195712
        %1374 = vst.msk [vmem:[#allocation4] sm:$0xff] %vm1373, %v1371
        %v1375 = vld [vmem:[#allocation2] sm:$0xff]
        %v1376 = vld [vmem:[#allocation3] sm:$0xff]
        %1377 = vrot.lane.b32.xlu0 %v846, 104
        %v1378 = vpop.permute.xlu0 %1377
        %1380 = vrot.lane.b32.xlu0 %v1375, 104
        %v1381 = vpop.permute.xlu0 %1380
        %v1382 = vsel %vm851, %v1378, 0
        %v1384 = vsel %vm851, %v1381, 0
        %1386 = vmatprep.subr.mxu0 0.0
        %1387 = vmatpush1.xpose.msra.mxu0 %v1384
        %1388 = vmatprep.subr.mxu0 0.0
        %1389 = vmatpush1.xpose.msra.mxu0 0.0
        %1390 = vmatprep.subr.mxu0 0.0
        %1391 = vmatpush1.xpose.msra.mxu0 0.0
        %1392 = vmatprep.subr.mxu0 0.0
        %1393 = vmatpush1.xpose.msra.mxu0 0.0
        %1394 = vmatprep.subr.mxu0 0.0
        %1395 = vmatpush1.xpose.msra.mxu0 0.0
        %1396 = vmatprep.subr.mxu0 0.0
        %1397 = vmatpush1.xpose.msra.mxu0 0.0
        %1398 = vmatprep.subr.mxu0 0.0
        %1399 = vmatpush1.xpose.msra.mxu0 0.0
        %1400 = vmatprep.subr.mxu0 0.0
        %1401 = vmatpush1.xpose.msra.mxu0 0.0
        %1402 = vmatprep.subr.mxu0 0.0
        %1403 = vmatpush1.xpose.msra.mxu0 0.0
        %1404 = vmatprep.subr.mxu0 0.0
        %1405 = vmatpush1.xpose.msra.mxu0 0.0
        %1406 = vmatprep.subr.mxu0 0.0
        %1407 = vmatpush1.xpose.msra.mxu0 0.0
        %1408 = vmatprep.subr.mxu0 0.0
        %1409 = vmatpush1.xpose.msra.mxu0 0.0
        %1410 = vmatprep.subr.mxu0 0.0
        %1411 = vmatpush1.xpose.msra.mxu0 0.0
        %1412 = vmatprep.subr.mxu0 0.0
        %1413 = vmatpush1.xpose.msra.mxu0 0.0
        %1414 = vmatprep.subr.mxu0 0.0
        %1415 = vmatpush1.xpose.msra.mxu0 0.0
        %1416 = vmatprep.subr.mxu0 0.0
        %1417 = vmatpush1.xpose.msra.mxu0 0.0
        %1418 = vmatprep.subr.mxu0 0.0
        %1419 = vmatpush1.xpose.msra.mxu0 0.0
        %1420 = vmatprep.subr.mxu0 0.0
        %1421 = vmatpush1.xpose.msra.mxu0 0.0
        %1422 = vmatprep.subr.mxu0 0.0
        %1423 = vmatpush1.xpose.msra.mxu0 0.0
        %1424 = vmatprep.subr.mxu0 0.0
        %1425 = vmatpush1.xpose.msra.mxu0 0.0
        %1426 = vmatprep.subr.mxu0 0.0
        %1427 = vmatpush1.xpose.msra.mxu0 0.0
        %1428 = vmatprep.subr.mxu0 0.0
        %1429 = vmatpush1.xpose.msra.mxu0 0.0
        %1430 = vmatprep.subr.mxu0 0.0
        %1431 = vmatpush1.xpose.msra.mxu0 0.0
        %1432 = vmatprep.subr.mxu0 0.0
        %1433 = vmatpush1.xpose.msra.mxu0 0.0
        %1434 = vmatprep.subr.mxu0 0.0
        %1435 = vmatpush1.xpose.msra.mxu0 0.0
        %1436 = vmatprep.subr.mxu0 0.0
        %1437 = vmatpush1.xpose.msra.mxu0 0.0
        %1438 = vmatprep.subr.mxu0 0.0
        %1439 = vmatpush1.xpose.msra.mxu0 0.0
        %1440 = vmatprep.subr.mxu0 0.0
        %1441 = vmatpush1.xpose.msra.mxu0 0.0
        %1442 = vmatprep.subr.mxu0 0.0
        %1443 = vmatpush1.xpose.msra.mxu0 0.0
        %1444 = vmatprep.subr.mxu0 0.0
        %1445 = vmatpush1.xpose.msra.mxu0 0.0
        %1446 = vmatprep.subr.mxu0 0.0
        %1447 = vmatpush1.xpose.msra.mxu0 0.0
        %1448 = vmatprep.subr.mxu0 0.0
        %1449 = vmatpush1.xpose.msra.mxu0 0.0
        %1450 = vmatprep.mubr.f32.mxu0 0.0
        %1451 = vmatmul.mubr.f32.gmra.mrb[0].mxu0 %v1382
        %v1452 = vpop.f32.mrb[0].mxu0
        %v1453 = vadd.f32 0.0, %v1452
        %v1454 = vpop.f32.mrb[0].mxu0
        %1455 = vdwg.mxu0
        %v1456 = vadd.f32 %v1277, %v1453
        %v1457 = vsel %vm851, %v1453, -inf
        %1458 = vmax.xlane.f32.xlu0 %v1457
        %v1459 = vpop.xlane.xlu0 %1458
        %v1460 = vsub.f32 %v1453, %v1459
        %v1461 = vmul.f32 %v1460, 1.442695
        %v1462 = vpow.pop %v1461
        %v1463 = vsel %vm851, %v1462, 0.0
        %1464 = vadd.xlane.f32.xlu0 %v1463
        %v1465 = vpop.xlane.xlu0 %1464
        %v1466 = vrcp.pop %v1465
        %v1467 = vmul.f32 %v1465, %v1466
        %v1468 = vsub.f32 2.0, %v1467
        %v1469 = vmul.f32 %v1466, %v1468
        %v1470 = vmul.f32 %v1462, %v1469
        %1472 = vrot.lane.b32.xlu0 %v1376, 104
        %v1473 = vpop.permute.xlu0 %1472
        %v1476 = vsel %vm851, %v1470, 0
        %1478 = vmatprep.subr.mxu0 0.0
        %1479 = vmatpush1.msra.mxu0 %v1473
        %1480 = vmatprep.subr.mxu0 0.0
        %1481 = vmatpush1.msra.mxu0 0.0
        %1482 = vmatprep.subr.mxu0 0.0
        %1483 = vmatpush1.msra.mxu0 0.0
        %1484 = vmatprep.subr.mxu0 0.0
        %1485 = vmatpush1.msra.mxu0 0.0
        %1486 = vmatprep.subr.mxu0 0.0
        %1487 = vmatpush1.msra.mxu0 0.0
        %1488 = vmatprep.subr.mxu0 0.0
        %1489 = vmatpush1.msra.mxu0 0.0
        %1490 = vmatprep.subr.mxu0 0.0
        %1491 = vmatpush1.msra.mxu0 0.0
        %1492 = vmatprep.subr.mxu0 0.0
        %1493 = vmatpush1.msra.mxu0 0.0
        %1494 = vmatprep.subr.mxu0 0.0
        %1495 = vmatpush1.msra.mxu0 0.0
        %1496 = vmatprep.subr.mxu0 0.0
        %1497 = vmatpush1.msra.mxu0 0.0
        %1498 = vmatprep.subr.mxu0 0.0
        %1499 = vmatpush1.msra.mxu0 0.0
        %1500 = vmatprep.subr.mxu0 0.0
        %1501 = vmatpush1.msra.mxu0 0.0
        %1502 = vmatprep.subr.mxu0 0.0
        %1503 = vmatpush1.msra.mxu0 0.0
        %1504 = vmatprep.subr.mxu0 0.0
        %1505 = vmatpush1.msra.mxu0 0.0
        %1506 = vmatprep.subr.mxu0 0.0
        %1507 = vmatpush1.msra.mxu0 0.0
        %1508 = vmatprep.subr.mxu0 0.0
        %1509 = vmatpush1.msra.mxu0 0.0
        %1510 = vmatprep.subr.mxu0 0.0
        %1511 = vmatpush1.msra.mxu0 0.0
        %1512 = vmatprep.subr.mxu0 0.0
        %1513 = vmatpush1.msra.mxu0 0.0
        %1514 = vmatprep.subr.mxu0 0.0
        %1515 = vmatpush1.msra.mxu0 0.0
        %1516 = vmatprep.subr.mxu0 0.0
        %1517 = vmatpush1.msra.mxu0 0.0
        %1518 = vmatprep.subr.mxu0 0.0
        %1519 = vmatpush1.msra.mxu0 0.0
        %1520 = vmatprep.subr.mxu0 0.0
        %1521 = vmatpush1.msra.mxu0 0.0
        %1522 = vmatprep.subr.mxu0 0.0
        %1523 = vmatpush1.msra.mxu0 0.0
        %1524 = vmatprep.subr.mxu0 0.0
        %1525 = vmatpush1.msra.mxu0 0.0
        %1526 = vmatprep.subr.mxu0 0.0
        %1527 = vmatpush1.msra.mxu0 0.0
        %1528 = vmatprep.subr.mxu0 0.0
        %1529 = vmatpush1.msra.mxu0 0.0
        %1530 = vmatprep.subr.mxu0 0.0
        %1531 = vmatpush1.msra.mxu0 0.0
        %1532 = vmatprep.subr.mxu0 0.0
        %1533 = vmatpush1.msra.mxu0 0.0
        %1534 = vmatprep.subr.mxu0 0.0
        %1535 = vmatpush1.msra.mxu0 0.0
        %1536 = vmatprep.subr.mxu0 0.0
        %1537 = vmatpush1.msra.mxu0 0.0
        %1538 = vmatprep.subr.mxu0 0.0
        %1539 = vmatpush1.msra.mxu0 0.0
        %1540 = vmatprep.subr.mxu0 0.0
        %1541 = vmatpush1.msra.mxu0 0.0
        %1542 = vmatprep.mubr.f32.mxu0 0.0
        %1543 = vmatmul.mubr.f32.gmra.mrb[0].mxu0 %v1476
        %v1544 = vpop.f32.mrb[0].mxu0
        %v1545 = vadd.f32 0.0, %v1544
        %v1546 = vpop.f32.mrb[0].mxu0
        %1547 = vdwg.mxu0
        %1549 = vrot.lane.b32.xlu0 %v1545, 24
        %v1550 = vpop.permute.xlu0 %1549
        %vm1552 = vcmask 261312
        %1553 = vst.msk [vmem:[#allocation4] sm:$0xff] %vm1552, %v1550
        %v1554 = vld [vmem:[#allocation4] sm:$0xff]
        %v1555 = vld [vmem:[%s9] sm:$0xff]
        %v1556 = vld [vmem:[%s9 + $0x8] sm:$0xff]
        %v1557 = vld [vmem:[%s9 + $0x10] sm:$0xff]
        %v1558 = vld [vmem:[%s9 + $0x18] sm:$0xff]
        %v1559 = vld [vmem:[%s10] sm:$0x1]
        %v1561 = vlaneseq
        %v1562 = vshrl.u32 %v1561, 7
        %v1563 = vsub.s32 0, %v1562
        %v1564 = vrot.slane %v1559, %v1563
        %v1567 = vsel %vm775, %v1554, 0
        %1569 = vmatprep.subr.mxu0 0.0
        %1570 = vmatpush1.msra.mxu0 %v1555
        %1571 = vmatprep.subr.mxu0 0.0
        %1572 = vmatpush1.msra.mxu0 %v1556
        %1573 = vmatprep.subr.mxu0 0.0
        %1574 = vmatpush1.msra.mxu0 %v1557
        %1575 = vmatprep.subr.mxu0 0.0
        %1576 = vmatpush1.msra.mxu0 %v1558
        %1577 = vmatprep.subr.mxu0 0.0
        %1578 = vmatpush1.msra.mxu0 0.0
        %1579 = vmatprep.subr.mxu0 0.0
        %1580 = vmatpush1.msra.mxu0 0.0
        %1581 = vmatprep.subr.mxu0 0.0
        %1582 = vmatpush1.msra.mxu0 0.0
        %1583 = vmatprep.subr.mxu0 0.0
        %1584 = vmatpush1.msra.mxu0 0.0
        %1585 = vmatprep.subr.mxu0 0.0
        %1586 = vmatpush1.msra.mxu0 0.0
        %1587 = vmatprep.subr.mxu0 0.0
        %1588 = vmatpush1.msra.mxu0 0.0
        %1589 = vmatprep.subr.mxu0 0.0
        %1590 = vmatpush1.msra.mxu0 0.0
        %1591 = vmatprep.subr.mxu0 0.0
        %1592 = vmatpush1.msra.mxu0 0.0
        %1593 = vmatprep.subr.mxu0 0.0
        %1594 = vmatpush1.msra.mxu0 0.0
        %1595 = vmatprep.subr.mxu0 0.0
        %1596 = vmatpush1.msra.mxu0 0.0
        %1597 = vmatprep.subr.mxu0 0.0
        %1598 = vmatpush1.msra.mxu0 0.0
        %1599 = vmatprep.subr.mxu0 0.0
        %1600 = vmatpush1.msra.mxu0 0.0
        %1601 = vmatprep.subr.mxu0 0.0
        %1602 = vmatpush1.msra.mxu0 0.0
        %1603 = vmatprep.subr.mxu0 0.0
        %1604 = vmatpush1.msra.mxu0 0.0
        %1605 = vmatprep.subr.mxu0 0.0
        %1606 = vmatpush1.msra.mxu0 0.0
        %1607 = vmatprep.subr.mxu0 0.0
        %1608 = vmatpush1.msra.mxu0 0.0
        %1609 = vmatprep.subr.mxu0 0.0
        %1610 = vmatpush1.msra.mxu0 0.0
        %1611 = vmatprep.subr.mxu0 0.0
        %1612 = vmatpush1.msra.mxu0 0.0
        %1613 = vmatprep.subr.mxu0 0.0
        %1614 = vmatpush1.msra.mxu0 0.0
        %1615 = vmatprep.subr.mxu0 0.0
        %1616 = vmatpush1.msra.mxu0 0.0
        %1617 = vmatprep.subr.mxu0 0.0
        %1618 = vmatpush1.msra.mxu0 0.0
        %1619 = vmatprep.subr.mxu0 0.0
        %1620 = vmatpush1.msra.mxu0 0.0
        %1621 = vmatprep.subr.mxu0 0.0
        %1622 = vmatpush1.msra.mxu0 0.0
        %1623 = vmatprep.subr.mxu0 0.0
        %1624 = vmatpush1.msra.mxu0 0.0
        %1625 = vmatprep.subr.mxu0 0.0
        %1626 = vmatpush1.msra.mxu0 0.0
        %1627 = vmatprep.subr.mxu0 0.0
        %1628 = vmatpush1.msra.mxu0 0.0
        %1629 = vmatprep.subr.mxu0 0.0
        %1630 = vmatpush1.msra.mxu0 0.0
        %1631 = vmatprep.subr.mxu0 0.0
        %1632 = vmatpush1.msra.mxu0 0.0
        %1633 = vmatprep.mubr.f32.mxu0 0.0
        %1634 = vmatmul.mubr.f32.gmra.mrb[0].mxu0 %v1567
        %v1635 = vpop.f32.mrb[0].mxu0
        %v1636 = vadd.f32 %v1564, %v1635
        %v1637 = vpop.f32.mrb[0].mxu0
        %1638 = vdwg.mxu0
        %1639 = vst.msk [vmem:[%s578] sm:$0xff] %vm775, %v1636
        %v1640 = vmul.f32 %v1456, 0.25
        %1641 = vst.msk [vmem:[%s585] sm:$0xff] %vm851, %v1640
        %s1642 = sand.u32 %s308, 1
        %s1643 = scalar_lea.sflag [#allocation7], %s1642
        %s1644 = sand.u32 %s308, 1
        %s1645 = smul.addr %s1644, 8
        %s1646 = scalar_lea.vmem [#allocation17], %s1645
        %s1647 = sand.u32 %s336, 1
        %s1648 = scalar_lea.sflag [#allocation19], %s1647
        %s1649 = sand.u32 %s336, 1
        %s1650 = smul.addr %s1649, 8
        %s1651 = scalar_lea.vmem [#allocation18], %s1650
        // Predicated region
        $region97: #{tpu_custom_call.1} parent=63 // pred_check
          %p1652 = pneg %p318
        $region98: #{tpu_custom_call.1} parent=63 // pred_check_branch
          %1654 = sbr.rel (%p1652) target = $region100
        $region99: #{tpu_custom_call.1} parent=63 // pred_region
          %s1656 = ssub.s32 128, 128
          %1657 = vsyncadd %s1643, %s1656
          %s1658 = sadd.s32 %s43, %s42
          %s1659 = smul.addr %s1658, 128
          %s1660 = scalar_lea.hbm %s11, %s1659
          %s1662 = sshll.u32 %s1646, 4
          %s1663 = int_to_ptr.vmem [resolvable:$true] %s1662
          %1665 = dma.vmem_to_hbm [thread:$0]  %s1663, 128, %s1660, %s1643
        $region100: #{tpu_custom_call.1} parent=63 // pred_fallthru
          _
        // Predicated region
        $region101: #{tpu_custom_call.1} parent=63 // pred_check
          %p1666 = pneg %p346
        $region102: #{tpu_custom_call.1} parent=63 // pred_check_branch
          %1668 = sbr.rel (%p1666) target = $region104
        $region103: #{tpu_custom_call.1} parent=63 // pred_region
          %s1670 = ssub.s32 128, 128
          %1671 = vsyncadd %s1648, %s1670
          %s1672 = sadd.s32 %s43, %s42
          %s1673 = smul.addr %s1672, 128
          %s1674 = scalar_lea.hbm %s12, %s1673
          %s1676 = sshll.u32 %s1651, 4
          %s1677 = int_to_ptr.vmem [resolvable:$true] %s1676
          %1679 = dma.vmem_to_hbm [thread:$0]  %s1677, 128, %s1674, %s1648
        $region104: #{tpu_custom_call.1} parent=63 // pred_fallthru
          _
      $region64: #{tpu_custom_call.1} parent=5 // pred_fallthru
        _
      %p1680 = scmp.le.s32.totalorder 2, %s33
      // Predicated region
      $region105: #{tpu_custom_call.1} parent=5 // pred_check
        %p1681 = pneg %p1680
      $region106: #{tpu_custom_call.1} parent=5 // pred_check_branch
        %1683 = sbr.rel (%p1681) target = $region108
      $region107: #{tpu_custom_call.1} parent=5 // pred_region
        %s1684 = ssub.s32 %s33, 2
        // Predicated region
        $region109: #{tpu_custom_call.1} parent=107 // pred_check
          %p1685 = pneg %p324
        $region110: #{tpu_custom_call.1} parent=107 // pred_check_branch
          %1687 = sbr.rel (%p1685) target = $region112
        $region111: #{tpu_custom_call.1} parent=107 // pred_region
          %s1688 = sand.u32 %s309, 1
          %s1689 = scalar_lea.sflag [#allocation7], %s1688
          %s1690 = sand.u32 %s309, 1
          %s1691 = smul.addr %s1690, 8
          %s1692 = scalar_lea.vmem [#allocation17], %s1691
          %1693 = dma.done %s1689, 128
        $region112: #{tpu_custom_call.1} parent=107 // pred_fallthru
          _
        // Predicated region
        $region113: #{tpu_custom_call.1} parent=107 // pred_check
          %p1694 = pneg %p352
        $region114: #{tpu_custom_call.1} parent=107 // pred_check_branch
          %1696 = sbr.rel (%p1694) target = $region116
        $region115: #{tpu_custom_call.1} parent=107 // pred_region
          %s1697 = sand.u32 %s337, 1
          %s1698 = scalar_lea.sflag [#allocation19], %s1697
          %s1699 = sand.u32 %s337, 1
          %s1700 = smul.addr %s1699, 8
          %s1701 = scalar_lea.vmem [#allocation18], %s1700
          %1702 = dma.done %s1698, 128
        $region116: #{tpu_custom_call.1} parent=107 // pred_fallthru
          _
      $region108: #{tpu_custom_call.1} parent=5 // pred_fallthru
        _
    $region6: #{tpu_custom_call.1} parent=1 // loop_footer
      %s37 = sadd.s32 1, %s33
    $region7: #{tpu_custom_call.1} parent=1 // loop_footer_branch
      %32 = sbr.rel target = $region3
    $region8: #{tpu_custom_call.1} parent=1 // loop_exit
      _
    %1703 = vsyncpa [#allocation6], 1
    %s1704 = scalar_lea.sflag [#allocation6], 1
    %1705 = vsyncpa %s1704, 1
    %1706 = vsyncpa [#allocation9], 1
    %s1707 = scalar_lea.sflag [#allocation9], 1
    %1708 = vsyncpa %s1707, 1
    %1709 = vsyncpa [#allocation12], 1
    %1710 = vsyncpa [#allocation15], 1
    %1711 = vsyncpa [#allocation7], 1
    %s1712 = scalar_lea.sflag [#allocation7], 1
    %1713 = vsyncpa %s1712, 1
    %1714 = vsyncpa [#allocation19], 1
    %s1715 = scalar_lea.sflag [#allocation19], 1
    %1716 = vsyncpa %s1715, 1

</llo_original>
